<compile_context>
chip_gen: v5e
topology: v5e:2x2
jax: 0.10.0
libtpu: 0.0.40
codegen_flags: <defaults>
</compile_context>

<pallas_src>
import functools

import jax
import jax.numpy as jnp
from jax import lax
from jax.experimental import pallas as pl
from jax.experimental.pallas import tpu as pltpu


CONFIG = dict(
    activation="relu",
    dim_neigh_rep=32,
    num_heads_cell_encoder=2,
    ff_hidden_dim_cell_encoder=64,
    encoder_out_dim=32,
    dropout=0.0,                      # inference: dropout is identity
    num_layers_cell_encoder=1,        # TODO(synk): single encoder layer only
    norm="layer",
    transformer_type_cell_rep="vanilla",
    cell_demo_modular=True,
    cell_demo_modular_type="hadamard",
    cell_demo_in_dim=4,
    cell_demo_hidden_dim=16,
    pipeline="cell_annotation",
    num_classes=4,
    num_genes=16,
)


# ---------------------------------------------------------------------------
# tiling helpers
# ---------------------------------------------------------------------------
def _pick_batch_tile(b, cap=64):
    """Largest divisor of b that is <= cap and leaves >= 2 grid steps."""
    if b < 2:
        return max(b, 1)
    limit = max(1, min(cap, b // 2))
    for t in range(limit, 0, -1):
        if b % t == 0:
            return t
    return 1


def _pick_row_tile(m, cap=512):
    """Row tile: full array if small, else a multiple-of-8 divisor <= cap."""
    if m <= cap:
        return m
    for t in range(cap - cap % 8, 7, -8):
        if m % t == 0:
            return t
    return m


def _rep(shape):
    """Replicated (weight) BlockSpec: same full block every grid step."""
    return pl.BlockSpec(shape, lambda *_: (0,) * len(shape))


# ---------------------------------------------------------------------------
# Kernel 1: neighbor embedder  relu(exp @ Wx + bx) + relu(dist * wd + bd)
# ---------------------------------------------------------------------------
def _neigh_embed_kernel(exp_ref, dist_ref, wx_ref, bx_ref, wd_ref, bd_ref,
                        o_ref):
    e = jnp.dot(exp_ref[...], wx_ref[...],
                preferred_element_type=jnp.float32) + bx_ref[...]
    e = jnp.maximum(e, 0.0)
    # distance Linear has in_features == 1 -> pure VPU broadcast mul-add.
    d = jnp.maximum(dist_ref[...] * wd_ref[...] + bd_ref[...], 0.0)
    o_ref[...] = e + d


def neigh_embed(neighbor_exp, neighbor_dist, p):
    B, N, G = neighbor_exp.shape
    D = p["emb_wx"].shape[1]
    M = B * N
    TM = _pick_row_tile(M)
    exp2 = neighbor_exp.reshape(M, G)
    dist2 = neighbor_dist.reshape(M, 1)
    out = pl.pallas_call(
        _neigh_embed_kernel,
        grid=(M // TM,),
        in_specs=[pl.BlockSpec((TM, G), lambda i: (i, 0)),
                  pl.BlockSpec((TM, 1), lambda i: (i, 0)),
                  _rep((G, D)), _rep((1, D)), _rep((1, D)), _rep((1, D))],
        out_specs=pl.BlockSpec((TM, D), lambda i: (i, 0)),
        out_shape=jax.ShapeDtypeStruct((M, D), jnp.float32),
        compiler_params=pltpu.CompilerParams(
            dimension_semantics=("parallel",)),
    )(exp2, dist2, p["emb_wx"], p["emb_bx"], p["emb_wd"], p["emb_bd"])
    return out.reshape(B, N, D)


# ---------------------------------------------------------------------------
# Kernel 2: per-cell embed + reconstruction + hadamard modulator (once).
# ---------------------------------------------------------------------------
def _cell_embed_kernel(cexp_ref, ss_ref, wc_ref, bc_ref, wr_ref, br_ref,
                       wm_ref, bm_ref, cemb_ref, recon_ref, mod_ref):
    ce = jnp.dot(cexp_ref[...], wc_ref[...],
                 preferred_element_type=jnp.float32) + bc_ref[...]
    ce = jnp.maximum(ce, 0.0)
    cemb_ref[...] = ce
    recon_ref[...] = jnp.dot(ce, wr_ref[...],
                             preferred_element_type=jnp.float32) + br_ref[...]
    # TODO(synk): PyTorch runs the hadamard modulator in float64; float32 here.
    m = jnp.dot(ss_ref[...], wm_ref[...],
                preferred_element_type=jnp.float32) + bm_ref[...]
    mod_ref[...] = jnp.maximum(m, 0.0)        # dropout = identity (inference)


def cell_embed(cell_exp, shape_size_cc, p):
    B, G = cell_exp.shape
    D = p["emb_wc"].shape[1]
    Dout = p["mod_w"].shape[1]
    TBC = _pick_row_tile(B)
    return pl.pallas_call(
        _cell_embed_kernel,
        grid=(B // TBC,),
        in_specs=[pl.BlockSpec((TBC, G), lambda i: (i, 0)),
                  pl.BlockSpec((TBC, 4), lambda i: (i, 0)),
                  _rep((G, D)), _rep((1, D)),
                  _rep((D, G)), _rep((1, G)),
                  _rep((4, Dout)), _rep((1, Dout))],
        out_specs=[pl.BlockSpec((TBC, D), lambda i: (i, 0)),
                   pl.BlockSpec((TBC, G), lambda i: (i, 0)),
                   pl.BlockSpec((TBC, Dout), lambda i: (i, 0))],
        out_shape=[jax.ShapeDtypeStruct((B, D), jnp.float32),
                   jax.ShapeDtypeStruct((B, G), jnp.float32),
                   jax.ShapeDtypeStruct((B, Dout), jnp.float32)],
        compiler_params=pltpu.CompilerParams(
            dimension_semantics=("parallel",)),
    )(cell_exp, shape_size_cc, p["emb_wc"], p["emb_bc"],
      p["emb_wr"], p["emb_br"], p["mod_w"], p["mod_b"])


# ---------------------------------------------------------------------------
# Kernel 3: TB cells per step: pre-norm transformer encoder layer (fused QKV,
# per-head out-proj accumulation), last_fc, hadamard modulation, and the
# AnnotationDownStream epilogue (pool / classifier / decoder / L2 reg).
# ---------------------------------------------------------------------------
def _encoder_kernel(x_ref, mod_ref, cemb_ref,
                    ln_ref, wqkv_ref, bqkv_ref, woh_ref, bo_ref,
                    w1_ref, b1_ref, w2_ref, b2_ref, wfc_ref, bfc_ref,
                    annc_ref, annp_ref, annb_ref, decw_ref, decb_ref,
                    cls_ref, rdec_ref, lssq_ref, *, num_heads):
    tb, n, d = x_ref.shape
    hd = d // num_heads
    dout = wfc_ref.shape[1]
    scale = 1.0 / float(hd) ** 0.5

    def layernorm(v, g, b):
        mu = jnp.mean(v, axis=-1, keepdims=True)
        var = jnp.mean((v - mu) ** 2, axis=-1, keepdims=True)
        return (v - mu) * lax.rsqrt(var + 1e-5) * g + b

    # all token-wise matmuls in 2-D with M = tb * n rows (big MXU M dim)
    x = x_ref[...].reshape(tb * n, d)

    # --- pre-norm multi-head self-attention (non-causal), fused QKV ---------
    xn = layernorm(x, ln_ref[0:1], ln_ref[1:2])
    qkv = jnp.dot(xn, wqkv_ref[...],
                  preferred_element_type=jnp.float32) + bqkv_ref[...]
    qkv3 = qkv.reshape(tb, n, 3 * d)

    attn = jnp.zeros((tb * n, d), jnp.float32)
    for h in range(num_heads):                       # static unroll, H small
        q = qkv3[:, :, h * hd:(h + 1) * hd]
        k = qkv3[:, :, d + h * hd:d + (h + 1) * hd]
        v = qkv3[:, :, 2 * d + h * hd:2 * d + (h + 1) * hd]
        s = jnp.einsum("bnd,bmd->bnm", q, k,
                       preferred_element_type=jnp.float32) * scale
        s = s - jnp.max(s, axis=-1, keepdims=True)
        p = jnp.exp(s)
        p = p * pl.reciprocal(jnp.sum(p, axis=-1, keepdims=True), approx=True)
        ctx = jnp.einsum("bnm,bmd->bnd", p, v,
                         preferred_element_type=jnp.float32)
        # per-head rows of W_o (woh[h] is (hd, d)) -> no lane-axis head concat
        attn = attn + jnp.dot(ctx.reshape(tb * n, hd), woh_ref[h],
                              preferred_element_type=jnp.float32)
    x = x + attn + bo_ref[...]

    # --- pre-norm feed-forward (ReLU) ----------------------------------------
    xn2 = layernorm(x, ln_ref[2:3], ln_ref[3:4])
    h1 = jnp.dot(xn2, w1_ref[...],
                 preferred_element_type=jnp.float32) + b1_ref[...]
    h1 = jnp.maximum(h1, 0.0)
    x = x + jnp.dot(h1, w2_ref[...],
                    preferred_element_type=jnp.float32) + b2_ref[...]

    # --- last_fc projection to encoder_out_dim -------------------------------
    y = jnp.dot(x, wfc_ref[...],
                preferred_element_type=jnp.float32) + bfc_ref[...]   # (tb*n, dout)

    # --- pooling over neighbors via a 0/1 pooling matrix on the MXU ----------
    row_id = lax.broadcasted_iota(jnp.int32, (tb, tb * n), 0)
    col_id = lax.broadcasted_iota(jnp.int32, (tb, tb * n), 1)
    pool = jnp.where((col_id >= row_id * n) & (col_id < (row_id + 1) * n),
                     1.0, 0.0)
    ysum = jnp.dot(pool, y, preferred_element_type=jnp.float32)      # (tb, dout)
    ysqsum = jnp.dot(pool, y * y, preferred_element_type=jnp.float32)

    # --- hadamard cell-demo modulation (per-cell gate, precomputed) ----------
    # rep = y * mod  (mod constant over neighbors), so:
    #   mean_n(rep)   = mean_n(y) * mod
    #   sum(rep^2)    = sum_d(sum_n(y^2) * mod^2)
    mod = mod_ref[0]                                                 # (tb, dout)
    pooled = (ysum * (1.0 / n)) * mod
    lssq = jnp.sum(ysqsum * (mod * mod), axis=-1, keepdims=True)     # (tb, 1)

    # --- AnnotationDownStream (synthetic, fused epilogue) ---------------------
    cemb = cemb_ref[0]                                               # (tb, d)
    cls = (jnp.dot(cemb, annc_ref[...], preferred_element_type=jnp.float32)
           + jnp.dot(pooled, annp_ref[...], preferred_element_type=jnp.float32)
           + annb_ref[...])
    rdec = jnp.dot(pooled, decw_ref[...],
                   preferred_element_type=jnp.float32) + decb_ref[...]

    cls_ref[0] = cls
    rdec_ref[0] = rdec
    lssq_ref[0] = lssq


def encoder_downstream(x, mod, cell_emb, enc, params, num_heads):
    B, N, D = x.shape
    H = num_heads
    hd = D // H
    FF = enc["w1"].shape[1]
    Dout = enc["wfc"].shape[1]
    C = params["ann_b"].shape[-1]
    G = params["dec_w"].shape[1]

    TB = _pick_batch_tile(B)
    nb = B // TB
    mod_t = mod.reshape(nb, TB, Dout)
    cemb_t = cell_emb.reshape(nb, TB, D)

    in_specs = [
        pl.BlockSpec((TB, N, D), lambda b: (b, 0, 0)),      # x tile
        pl.BlockSpec((1, TB, Dout), lambda b: (b, 0, 0)),   # modulator gate
        pl.BlockSpec((1, TB, D), lambda b: (b, 0, 0)),      # cell embedding
        _rep((4, D)),                                       # ln1g/ln1b/ln2g/ln2b
        _rep((D, 3 * D)), _rep((1, 3 * D)),                 # fused QKV
        _rep((H, hd, D)), _rep((1, D)),                     # per-head W_o, b_o
        _rep((D, FF)), _rep((1, FF)),                       # FFN 1
        _rep((FF, D)), _rep((1, D)),                        # FFN 2
        _rep((D, Dout)), _rep((1, Dout)),                   # last_fc
        _rep((D, C)), _rep((Dout, C)), _rep((1, C)),        # classifier
        _rep((Dout, G)), _rep((1, G)),                      # decoder recon
    ]
    out_specs = [
        pl.BlockSpec((1, TB, C), lambda b: (b, 0, 0)),
        pl.BlockSpec((1, TB, G), lambda b: (b, 0, 0)),
        pl.BlockSpec((1, TB, 1), lambda b: (b, 0, 0)),
    ]
    out_shape = [
        jax.ShapeDtypeStruct((nb, TB, C), jnp.float32),
        jax.ShapeDtypeStruct((nb, TB, G), jnp.float32),
        jax.ShapeDtypeStruct((nb, TB, 1), jnp.float32),
    ]
    cls, rdec, lssq = pl.pallas_call(
        functools.partial(_encoder_kernel, num_heads=H),
        grid=(nb,),
        in_specs=in_specs,
        out_specs=out_specs,
        out_shape=out_shape,
        compiler_params=pltpu.CompilerParams(
            dimension_semantics=("parallel",)),
    )(x, mod_t, cemb_t,
      enc["ln"], enc["wqkv"], enc["bqkv"], enc["woh"], enc["bo"],
      enc["w1"], enc["b1"], enc["w2"], enc["b2"], enc["wfc"], enc["bfc"],
      params["ann_wc"], params["ann_wp"], params["ann_b"],
      params["dec_w"], params["dec_b"])
    return cls.reshape(B, C), rdec.reshape(B, G), lssq.reshape(B, 1)


# ---------------------------------------------------------------------------
# Parameters (deterministic synthetic init, stored in kernel-friendly packing)
# ---------------------------------------------------------------------------
def init_params(key, cfg):
    G, D = cfg["num_genes"], cfg["dim_neigh_rep"]
    Dout, FF, C = (cfg["encoder_out_dim"], cfg["ff_hidden_dim_cell_encoder"],
                   cfg["num_classes"])
    H = cfg["num_heads_cell_encoder"]
    hd = D // H
    keys = iter(jax.random.split(key, 24))
    w = lambda s: (0.05 * jax.random.normal(next(keys), s)).astype(jnp.float32)
    z = lambda s: jnp.zeros(s, jnp.float32)

    # LayerNorm params packed as rows: [ln1_gamma, ln1_beta, ln2_gamma, ln2_beta]
    ln = jnp.stack([jnp.ones((D,)), jnp.zeros((D,)),
                    jnp.ones((D,)), jnp.zeros((D,))]).astype(jnp.float32)

    enc = dict(
        ln=ln,
        wqkv=w((D, 3 * D)), bqkv=z((1, 3 * D)),   # [Wq | Wk | Wv] fused
        woh=w((H, hd, D)), bo=z((1, D)),          # W_o reshaped per head
        w1=w((D, FF)), b1=z((1, FF)),
        w2=w((FF, D)), b2=z((1, D)),
        wfc=w((D, Dout)), bfc=z((1, Dout)),
    )
    return dict(
        # SpatialTEmbedder (synthetic)
        emb_wx=w((G, D)), emb_bx=z((1, D)),
        emb_wd=w((1, D)), emb_bd=z((1, D)),
        emb_wc=w((G, D)), emb_bc=z((1, D)),
        emb_wr=w((D, G)), emb_br=z((1, G)),
        # hadamard cell-demo modulator (Linear(4, Dout) + ReLU)
        mod_w=w((4, Dout)), mod_b=z((1, Dout)),
        enc=enc,
        # AnnotationDownStream (synthetic), classifier weight pre-split
        ann_wc=w((D, C)), ann_wp=w((Dout, C)), ann_b=z((1, C)),
        dec_w=w((Dout, G)), dec_b=z((1, G)),
    )


# ---------------------------------------------------------------------------
# CATLAS forward (pipeline == 'cell_annotation', cell_demo_modular hadamard)
# ---------------------------------------------------------------------------
def catlas_forward(params, cfg, neighbor_exp, neighbor_dist, neighbor_size,
                   neighbor_shape, cell_exp, cell_size, cell_shape):
    B, N, G = neighbor_exp.shape
    Dout = cfg["encoder_out_dim"]

    # --- SpatialTEmbedder -----------------------------------------------------
    # TODO(synk): original SpatialTEmbedder definition is not provided; using
    # expression + distance linear embeddings with an MSE reconstruction loss
    # (cell_size / cell_shape conditioning omitted).
    neighborhood_rep_emb = neigh_embed(neighbor_exp, neighbor_dist, params)

    shape_size_cc = jnp.concatenate(
        [neighbor_size[:, None], neighbor_shape], axis=-1)        # (B, 4)
    cell_emb, recon, mod = cell_embed(cell_exp, shape_size_cc, params)
    recon_loss = jnp.mean((recon - cell_exp) ** 2)

    # --- Encoder + hadamard modulation + AnnotationDownStream (fused) --------
    # TODO(synk): original Encoder / AnnotationDownStream definitions are not
    # provided; pre-norm transformer layer + last_fc, then mean-pool +
    # concat(cell_emb) classifier, MSE decoder recon and L2 latent regularizer.
    output, recon_dec, lssq = encoder_downstream(
        neighborhood_rep_emb, mod, cell_emb, params["enc"], params,
        cfg["num_heads_cell_encoder"])

    recon_loss_dec = jnp.mean((recon_dec - cell_exp) ** 2)
    ls_reg = jnp.sum(lssq) / (B * N * Dout)

    return output, recon_loss, recon_loss_dec, ls_reg


if __name__ == "__main__":
    cfg = CONFIG
    B, N, G = 2, 8, cfg["num_genes"]

    key = jax.random.PRNGKey(0)
    k = jax.random.split(key, 8)
    neighbor_exp = jax.random.uniform(k[0], (B, N, G), jnp.float32)
    neighbor_dist = jax.random.uniform(k[1], (B, N), jnp.float32)
    neighbor_size = jax.random.uniform(k[2], (B,), jnp.float32)
    neighbor_shape = jax.random.uniform(k[3], (B, 3), jnp.float32)
    cell_exp = jax.random.uniform(k[4], (B, G), jnp.float32)
    cell_size = jax.random.uniform(k[5], (B,), jnp.float32)
    cell_shape = jax.random.uniform(k[6], (B, 3), jnp.float32)

    params = init_params(k[7], cfg)

    fwd = jax.jit(
        lambda p, ne, nd, ns, nsh, ce, cs, csh: catlas_forward(
            p, cfg, ne, nd, ns, nsh, ce, cs, csh))
    out = fwd(params, neighbor_exp, neighbor_dist, neighbor_size,
              neighbor_shape, cell_exp, cell_size, cell_shape)
    out = jax.tree_util.tree_map(jax.block_until_ready, out)
    assert out[0].shape == (B, cfg["num_classes"])
    print("KERNEL_OK")
</pallas_src>

<mosaic_0001>
module attributes {stable_mosaic.version = 11 : i64} {
  func.func @_neigh_embed_kernel(%arg0: i32, %arg1: memref<16x16xf32, #tpu.memory_space<vmem>>, %arg2: memref<16x1xf32, #tpu.memory_space<vmem>>, %arg3: memref<16x32xf32, #tpu.memory_space<vmem>>, %arg4: memref<1x32xf32, #tpu.memory_space<vmem>>, %arg5: memref<1x32xf32, #tpu.memory_space<vmem>>, %arg6: memref<1x32xf32, #tpu.memory_space<vmem>>, %arg7: memref<16x32xf32, #tpu.memory_space<vmem>>) attributes {dimension_semantics = [#tpu.dimension_semantics<parallel>], iteration_bounds = array<i64: 1>, scalar_prefetch = 0 : i64, scratch_operands = 0 : i64, tpu.core_type = #tpu.core_type<tc>, window_params = [{transform_indices = @transform_0, window_bounds = array<i64: 16, 16>}, {transform_indices = @transform_1, window_bounds = array<i64: 16, 1>}, {pipeline_mode = #tpu.pipeline_mode<synchronous>, transform_indices = @transform_2, window_bounds = array<i64: 16, 32>}, {pipeline_mode = #tpu.pipeline_mode<synchronous>, transform_indices = @transform_3, window_bounds = array<i64: 1, 32>}, {pipeline_mode = #tpu.pipeline_mode<synchronous>, transform_indices = @transform_4, window_bounds = array<i64: 1, 32>}, {pipeline_mode = #tpu.pipeline_mode<synchronous>, transform_indices = @transform_5, window_bounds = array<i64: 1, 32>}, {transform_indices = @transform_6, window_bounds = array<i64: 16, 32>}]} {
    %c0 = arith.constant 0 : index
    %c0_0 = arith.constant 0 : index
    %0 = vector.load %arg1[%c0, %c0_0] : memref<16x16xf32, #tpu.memory_space<vmem>>, vector<16x16xf32>
    %c0_1 = arith.constant 0 : index
    %c0_2 = arith.constant 0 : index
    %1 = vector.load %arg3[%c0_1, %c0_2] : memref<16x32xf32, #tpu.memory_space<vmem>>, vector<16x32xf32>
    %cst = arith.constant dense<0.000000e+00> : vector<16x32xf32>
    %2 = tpu.matmul %0, %1, %cst {dimension_numbers = #tpu.dot_dimension_numbers<[1], [0], [0], [1], [0, 0, 1, 1], [], []>} : vector<16x16xf32>, vector<16x32xf32>, vector<16x32xf32> -> vector<16x32xf32>
    %c0_3 = arith.constant 0 : index
    %c0_4 = arith.constant 0 : index
    %3 = vector.load %arg4[%c0_3, %c0_4] : memref<1x32xf32, #tpu.memory_space<vmem>>, vector<1x32xf32>
    %4 = vector.broadcast %3 : vector<1x32xf32> to vector<16x32xf32>
    %5 = arith.addf %2, %4 : vector<16x32xf32>
    %cst_5 = arith.constant 0.000000e+00 : f32
    %6 = vector.broadcast %cst_5 : f32 to vector<16x32xf32>
    %7 = arith.maximumf %5, %6 : vector<16x32xf32>
    %c0_6 = arith.constant 0 : index
    %c0_7 = arith.constant 0 : index
    %8 = vector.load %arg2[%c0_6, %c0_7] : memref<16x1xf32, #tpu.memory_space<vmem>>, vector<16x1xf32>
    %c0_8 = arith.constant 0 : index
    %c0_9 = arith.constant 0 : index
    %9 = vector.load %arg5[%c0_8, %c0_9] : memref<1x32xf32, #tpu.memory_space<vmem>>, vector<1x32xf32>
    %10 = vector.broadcast %8 : vector<16x1xf32> to vector<16x32xf32>
    %11 = vector.broadcast %9 : vector<1x32xf32> to vector<16x32xf32>
    %12 = arith.mulf %10, %11 : vector<16x32xf32>
    %c0_10 = arith.constant 0 : index
    %c0_11 = arith.constant 0 : index
    %13 = vector.load %arg6[%c0_10, %c0_11] : memref<1x32xf32, #tpu.memory_space<vmem>>, vector<1x32xf32>
    %14 = vector.broadcast %13 : vector<1x32xf32> to vector<16x32xf32>
    %15 = arith.addf %12, %14 : vector<16x32xf32>
    %cst_12 = arith.constant 0.000000e+00 : f32
    %16 = vector.broadcast %cst_12 : f32 to vector<16x32xf32>
    %17 = arith.maximumf %15, %16 : vector<16x32xf32>
    %18 = arith.addf %7, %17 : vector<16x32xf32>
    %c0_13 = arith.constant 0 : index
    %c0_14 = arith.constant 0 : index
    %19 = vector.load %arg7[%c0_13, %c0_14] : memref<16x32xf32, #tpu.memory_space<vmem>>, vector<16x32xf32>
    tpu.vector_store %arg7[%c0_13, %c0_14], %18 {strides = array<i32>} : memref<16x32xf32, #tpu.memory_space<vmem>>, vector<16x32xf32>,
    return
  }
  func.func @transform_0(%arg0: i32) -> (i32, i32) {
    %c0_i32 = arith.constant 0 : i32
    %c0_i32_0 = arith.constant 0 : i32
    return %arg0, %c0_i32 : i32, i32
  }
  func.func @transform_1(%arg0: i32) -> (i32, i32) {
    %c0_i32 = arith.constant 0 : i32
    %c0_i32_0 = arith.constant 0 : i32
    return %arg0, %c0_i32 : i32, i32
  }
  func.func @transform_2(%arg0: i32) -> (i32, i32) {
    %c0_i32 = arith.constant 0 : i32
    %c0_i32_0 = arith.constant 0 : i32
    %c0_i32_1 = arith.constant 0 : i32
    return %c0_i32, %c0_i32_0 : i32, i32
  }
  func.func @transform_3(%arg0: i32) -> (i32, i32) {
    %c0_i32 = arith.constant 0 : i32
    %c0_i32_0 = arith.constant 0 : i32
    %c0_i32_1 = arith.constant 0 : i32
    return %c0_i32, %c0_i32_0 : i32, i32
  }
  func.func @transform_4(%arg0: i32) -> (i32, i32) {
    %c0_i32 = arith.constant 0 : i32
    %c0_i32_0 = arith.constant 0 : i32
    %c0_i32_1 = arith.constant 0 : i32
    return %c0_i32, %c0_i32_0 : i32, i32
  }
  func.func @transform_5(%arg0: i32) -> (i32, i32) {
    %c0_i32 = arith.constant 0 : i32
    %c0_i32_0 = arith.constant 0 : i32
    %c0_i32_1 = arith.constant 0 : i32
    return %c0_i32, %c0_i32_0 : i32, i32
  }
  func.func @transform_6(%arg0: i32) -> (i32, i32) {
    %c0_i32 = arith.constant 0 : i32
    %c0_i32_0 = arith.constant 0 : i32
    return %arg0, %c0_i32 : i32, i32
  }
}

module attributes {stable_mosaic.version = 11 : i64} {
  func.func @_cell_embed_kernel(%arg0: i32, %arg1: memref<2x16xf32, #tpu.memory_space<vmem>>, %arg2: memref<2x4xf32, #tpu.memory_space<vmem>>, %arg3: memref<16x32xf32, #tpu.memory_space<vmem>>, %arg4: memref<1x32xf32, #tpu.memory_space<vmem>>, %arg5: memref<32x16xf32, #tpu.memory_space<vmem>>, %arg6: memref<1x16xf32, #tpu.memory_space<vmem>>, %arg7: memref<4x32xf32, #tpu.memory_space<vmem>>, %arg8: memref<1x32xf32, #tpu.memory_space<vmem>>, %arg9: memref<2x32xf32, #tpu.memory_space<vmem>>, %arg10: memref<2x16xf32, #tpu.memory_space<vmem>>, %arg11: memref<2x32xf32, #tpu.memory_space<vmem>>) attributes {dimension_semantics = [#tpu.dimension_semantics<parallel>], iteration_bounds = array<i64: 1>, scalar_prefetch = 0 : i64, scratch_operands = 0 : i64, tpu.core_type = #tpu.core_type<tc>, window_params = [{transform_indices = @transform_0, window_bounds = array<i64: 2, 16>}, {transform_indices = @transform_1, window_bounds = array<i64: 2, 4>}, {pipeline_mode = #tpu.pipeline_mode<synchronous>, transform_indices = @transform_2, window_bounds = array<i64: 16, 32>}, {pipeline_mode = #tpu.pipeline_mode<synchronous>, transform_indices = @transform_3, window_bounds = array<i64: 1, 32>}, {pipeline_mode = #tpu.pipeline_mode<synchronous>, transform_indices = @transform_4, window_bounds = array<i64: 32, 16>}, {pipeline_mode = #tpu.pipeline_mode<synchronous>, transform_indices = @transform_5, window_bounds = array<i64: 1, 16>}, {pipeline_mode = #tpu.pipeline_mode<synchronous>, transform_indices = @transform_6, window_bounds = array<i64: 4, 32>}, {pipeline_mode = #tpu.pipeline_mode<synchronous>, transform_indices = @transform_7, window_bounds = array<i64: 1, 32>}, {transform_indices = @transform_8, window_bounds = array<i64: 2, 32>}, {transform_indices = @transform_9, window_bounds = array<i64: 2, 16>}, {transform_indices = @transform_10, window_bounds = array<i64: 2, 32>}]} {
    %c0 = arith.constant 0 : index
    %c0_0 = arith.constant 0 : index
    %0 = vector.load %arg1[%c0, %c0_0] : memref<2x16xf32, #tpu.memory_space<vmem>>, vector<2x16xf32>
    %c0_1 = arith.constant 0 : index
    %c0_2 = arith.constant 0 : index
    %1 = vector.load %arg3[%c0_1, %c0_2] : memref<16x32xf32, #tpu.memory_space<vmem>>, vector<16x32xf32>
    %cst = arith.constant dense<0.000000e+00> : vector<2x32xf32>
    %2 = tpu.matmul %0, %1, %cst {dimension_numbers = #tpu.dot_dimension_numbers<[1], [0], [0], [1], [0, 0, 1, 1], [], []>} : vector<2x16xf32>, vector<16x32xf32>, vector<2x32xf32> -> vector<2x32xf32>
    %c0_3 = arith.constant 0 : index
    %c0_4 = arith.constant 0 : index
    %3 = vector.load %arg4[%c0_3, %c0_4] : memref<1x32xf32, #tpu.memory_space<vmem>>, vector<1x32xf32>
    %4 = vector.broadcast %3 : vector<1x32xf32> to vector<2x32xf32>
    %5 = arith.addf %2, %4 : vector<2x32xf32>
    %cst_5 = arith.constant 0.000000e+00 : f32
    %6 = vector.broadcast %cst_5 : f32 to vector<2x32xf32>
    %7 = arith.maximumf %5, %6 : vector<2x32xf32>
    %c0_6 = arith.constant 0 : index
    %c0_7 = arith.constant 0 : index
    %8 = vector.load %arg9[%c0_6, %c0_7] : memref<2x32xf32, #tpu.memory_space<vmem>>, vector<2x32xf32>
    tpu.vector_store %arg9[%c0_6, %c0_7], %7 {strides = array<i32>} : memref<2x32xf32, #tpu.memory_space<vmem>>, vector<2x32xf32>,
    %c0_8 = arith.constant 0 : index
    %c0_9 = arith.constant 0 : index
    %9 = vector.load %arg5[%c0_8, %c0_9] : memref<32x16xf32, #tpu.memory_space<vmem>>, vector<32x16xf32>
    %cst_10 = arith.constant dense<0.000000e+00> : vector<2x16xf32>
    %10 = tpu.matmul %7, %9, %cst_10 {dimension_numbers = #tpu.dot_dimension_numbers<[1], [0], [0], [1], [0, 0, 1, 1], [], []>} : vector<2x32xf32>, vector<32x16xf32>, vector<2x16xf32> -> vector<2x16xf32>
    %c0_11 = arith.constant 0 : index
    %c0_12 = arith.constant 0 : index
    %11 = vector.load %arg6[%c0_11, %c0_12] : memref<1x16xf32, #tpu.memory_space<vmem>>, vector<1x16xf32>
    %12 = vector.broadcast %11 : vector<1x16xf32> to vector<2x16xf32>
    %13 = arith.addf %10, %12 : vector<2x16xf32>
    %c0_13 = arith.constant 0 : index
    %c0_14 = arith.constant 0 : index
    %14 = vector.load %arg10[%c0_13, %c0_14] : memref<2x16xf32, #tpu.memory_space<vmem>>, vector<2x16xf32>
    tpu.vector_store %arg10[%c0_13, %c0_14], %13 {strides = array<i32>} : memref<2x16xf32, #tpu.memory_space<vmem>>, vector<2x16xf32>,
    %c0_15 = arith.constant 0 : index
    %c0_16 = arith.constant 0 : index
    %15 = vector.load %arg2[%c0_15, %c0_16] : memref<2x4xf32, #tpu.memory_space<vmem>>, vector<2x4xf32>
    %c0_17 = arith.constant 0 : index
    %c0_18 = arith.constant 0 : index
    %16 = vector.load %arg7[%c0_17, %c0_18] : memref<4x32xf32, #tpu.memory_space<vmem>>, vector<4x32xf32>
    %cst_19 = arith.constant dense<0.000000e+00> : vector<2x32xf32>
    %17 = tpu.matmul %15, %16, %cst_19 {dimension_numbers = #tpu.dot_dimension_numbers<[1], [0], [0], [1], [0, 0, 1, 1], [], []>} : vector<2x4xf32>, vector<4x32xf32>, vector<2x32xf32> -> vector<2x32xf32>
    %c0_20 = arith.constant 0 : index
    %c0_21 = arith.constant 0 : index
    %18 = vector.load %arg8[%c0_20, %c0_21] : memref<1x32xf32, #tpu.memory_space<vmem>>, vector<1x32xf32>
    %19 = vector.broadcast %18 : vector<1x32xf32> to vector<2x32xf32>
    %20 = arith.addf %17, %19 : vector<2x32xf32>
    %cst_22 = arith.constant 0.000000e+00 : f32
    %21 = vector.broadcast %cst_22 : f32 to vector<2x32xf32>
    %22 = arith.maximumf %20, %21 : vector<2x32xf32>
    %c0_23 = arith.constant 0 : index
    %c0_24 = arith.constant 0 : index
    %23 = vector.load %arg11[%c0_23, %c0_24] : memref<2x32xf32, #tpu.memory_space<vmem>>, vector<2x32xf32>
    tpu.vector_store %arg11[%c0_23, %c0_24], %22 {strides = array<i32>} : memref<2x32xf32, #tpu.memory_space<vmem>>, vector<2x32xf32>,
    return
  }
  func.func @transform_0(%arg0: i32) -> (i32, i32) {
    %c0_i32 = arith.constant 0 : i32
    %c0_i32_0 = arith.constant 0 : i32
    return %arg0, %c0_i32 : i32, i32
  }
  func.func @transform_1(%arg0: i32) -> (i32, i32) {
    %c0_i32 = arith.constant 0 : i32
    %c0_i32_0 = arith.constant 0 : i32
    return %arg0, %c0_i32 : i32, i32
  }
  func.func @transform_2(%arg0: i32) -> (i32, i32) {
    %c0_i32 = arith.constant 0 : i32
    %c0_i32_0 = arith.constant 0 : i32
    %c0_i32_1 = arith.constant 0 : i32
    return %c0_i32, %c0_i32_0 : i32, i32
  }
  func.func @transform_3(%arg0: i32) -> (i32, i32) {
    %c0_i32 = arith.constant 0 : i32
    %c0_i32_0 = arith.constant 0 : i32
    %c0_i32_1 = arith.constant 0 : i32
    return %c0_i32, %c0_i32_0 : i32, i32
  }
  func.func @transform_4(%arg0: i32) -> (i32, i32) {
    %c0_i32 = arith.constant 0 : i32
    %c0_i32_0 = arith.constant 0 : i32
    %c0_i32_1 = arith.constant 0 : i32
    return %c0_i32, %c0_i32_0 : i32, i32
  }
  func.func @transform_5(%arg0: i32) -> (i32, i32) {
    %c0_i32 = arith.constant 0 : i32
    %c0_i32_0 = arith.constant 0 : i32
    %c0_i32_1 = arith.constant 0 : i32
    return %c0_i32, %c0_i32_0 : i32, i32
  }
  func.func @transform_6(%arg0: i32) -> (i32, i32) {
    %c0_i32 = arith.constant 0 : i32
    %c0_i32_0 = arith.constant 0 : i32
    %c0_i32_1 = arith.constant 0 : i32
    return %c0_i32, %c0_i32_0 : i32, i32
  }
  func.func @transform_7(%arg0: i32) -> (i32, i32) {
    %c0_i32 = arith.constant 0 : i32
    %c0_i32_0 = arith.constant 0 : i32
    %c0_i32_1 = arith.constant 0 : i32
    return %c0_i32, %c0_i32_0 : i32, i32
  }
  func.func @transform_8(%arg0: i32) -> (i32, i32) {
    %c0_i32 = arith.constant 0 : i32
    %c0_i32_0 = arith.constant 0 : i32
    return %arg0, %c0_i32 : i32, i32
  }
  func.func @transform_9(%arg0: i32) -> (i32, i32) {
    %c0_i32 = arith.constant 0 : i32
    %c0_i32_0 = arith.constant 0 : i32
    return %arg0, %c0_i32 : i32, i32
  }
  func.func @transform_10(%arg0: i32) -> (i32, i32) {
    %c0_i32 = arith.constant 0 : i32
    %c0_i32_0 = arith.constant 0 : i32
    return %arg0, %c0_i32 : i32, i32
  }
}

module attributes {stable_mosaic.version = 11 : i64} {
  func.func @_encoder_kernel(%arg0: i32, %arg1: memref<1x8x32xf32, #tpu.memory_space<vmem>>, %arg2: memref<1x1x32xf32, #tpu.memory_space<vmem>>, %arg3: memref<1x1x32xf32, #tpu.memory_space<vmem>>, %arg4: memref<4x32xf32, #tpu.memory_space<vmem>>, %arg5: memref<32x96xf32, #tpu.memory_space<vmem>>, %arg6: memref<1x96xf32, #tpu.memory_space<vmem>>, %arg7: memref<2x16x32xf32, #tpu.memory_space<vmem>>, %arg8: memref<1x32xf32, #tpu.memory_space<vmem>>, %arg9: memref<32x64xf32, #tpu.memory_space<vmem>>, %arg10: memref<1x64xf32, #tpu.memory_space<vmem>>, %arg11: memref<64x32xf32, #tpu.memory_space<vmem>>, %arg12: memref<1x32xf32, #tpu.memory_space<vmem>>, %arg13: memref<32x32xf32, #tpu.memory_space<vmem>>, %arg14: memref<1x32xf32, #tpu.memory_space<vmem>>, %arg15: memref<32x4xf32, #tpu.memory_space<vmem>>, %arg16: memref<32x4xf32, #tpu.memory_space<vmem>>, %arg17: memref<1x4xf32, #tpu.memory_space<vmem>>, %arg18: memref<32x16xf32, #tpu.memory_space<vmem>>, %arg19: memref<1x16xf32, #tpu.memory_space<vmem>>, %arg20: memref<1x1x4xf32, #tpu.memory_space<vmem>>, %arg21: memref<1x1x16xf32, #tpu.memory_space<vmem>>, %arg22: memref<1x1x1xf32, #tpu.memory_space<vmem>>) attributes {dimension_semantics = [#tpu.dimension_semantics<parallel>], iteration_bounds = array<i64: 2>, scalar_prefetch = 0 : i64, scratch_operands = 0 : i64, tpu.core_type = #tpu.core_type<tc>, window_params = [{transform_indices = @transform_0, window_bounds = array<i64: 1, 8, 32>}, {transform_indices = @transform_1, window_bounds = array<i64: 1, 1, 32>}, {transform_indices = @transform_2, window_bounds = array<i64: 1, 1, 32>}, {pipeline_mode = #tpu.pipeline_mode<synchronous>, transform_indices = @transform_3, window_bounds = array<i64: 4, 32>}, {pipeline_mode = #tpu.pipeline_mode<synchronous>, transform_indices = @transform_4, window_bounds = array<i64: 32, 96>}, {pipeline_mode = #tpu.pipeline_mode<synchronous>, transform_indices = @transform_5, window_bounds = array<i64: 1, 96>}, {pipeline_mode = #tpu.pipeline_mode<synchronous>, transform_indices = @transform_6, window_bounds = array<i64: 2, 16, 32>}, {pipeline_mode = #tpu.pipeline_mode<synchronous>, transform_indices = @transform_7, window_bounds = array<i64: 1, 32>}, {pipeline_mode = #tpu.pipeline_mode<synchronous>, transform_indices = @transform_8, window_bounds = array<i64: 32, 64>}, {pipeline_mode = #tpu.pipeline_mode<synchronous>, transform_indices = @transform_9, window_bounds = array<i64: 1, 64>}, {pipeline_mode = #tpu.pipeline_mode<synchronous>, transform_indices = @transform_10, window_bounds = array<i64: 64, 32>}, {pipeline_mode = #tpu.pipeline_mode<synchronous>, transform_indices = @transform_11, window_bounds = array<i64: 1, 32>}, {pipeline_mode = #tpu.pipeline_mode<synchronous>, transform_indices = @transform_12, window_bounds = array<i64: 32, 32>}, {pipeline_mode = #tpu.pipeline_mode<synchronous>, transform_indices = @transform_13, window_bounds = array<i64: 1, 32>}, {pipeline_mode = #tpu.pipeline_mode<synchronous>, transform_indices = @transform_14, window_bounds = array<i64: 32, 4>}, {pipeline_mode = #tpu.pipeline_mode<synchronous>, transform_indices = @transform_15, window_bounds = array<i64: 32, 4>}, {pipeline_mode = #tpu.pipeline_mode<synchronous>, transform_indices = @transform_16, window_bounds = array<i64: 1, 4>}, {pipeline_mode = #tpu.pipeline_mode<synchronous>, transform_indices = @transform_17, window_bounds = array<i64: 32, 16>}, {pipeline_mode = #tpu.pipeline_mode<synchronous>, transform_indices = @transform_18, window_bounds = array<i64: 1, 16>}, {transform_indices = @transform_19, window_bounds = array<i64: 1, 1, 4>}, {transform_indices = @transform_20, window_bounds = array<i64: 1, 1, 16>}, {transform_indices = @transform_21, window_bounds = array<i64: 1, 1, 1>}]} {
    %c0 = arith.constant 0 : index
    %c0_0 = arith.constant 0 : index
    %c0_1 = arith.constant 0 : index
    %0 = vector.load %arg1[%c0, %c0_0, %c0_1] : memref<1x8x32xf32, #tpu.memory_space<vmem>>, vector<1x8x32xf32>
    %1 = vector.shape_cast %0 : vector<1x8x32xf32> to vector<8x32xf32>
    %c0_2 = arith.constant 0 : index
    %c0_3 = arith.constant 0 : index
    %2 = vector.load %arg4[%c0_2, %c0_3] : memref<4x32xf32, #tpu.memory_space<vmem>>, vector<1x32xf32>
    %c1 = arith.constant 1 : index
    %c0_4 = arith.constant 0 : index
    %3 = vector.load %arg4[%c1, %c0_4] : memref<4x32xf32, #tpu.memory_space<vmem>>, vector<1x32xf32>
    %cst = arith.constant dense<0.000000e+00> : vector<8xf32>
    %4 = vector.multi_reduction <add>, %1, %cst [1] : vector<8x32xf32> to vector<8xf32>
    %5 = vector.shape_cast %4 : vector<8xf32> to vector<8x1xf32>
    %cst_5 = arith.constant 3.200000e+01 : f32
    %6 = vector.broadcast %cst_5 : f32 to vector<8x1xf32>
    %7 = arith.divf %5, %6 : vector<8x1xf32>
    %8 = vector.broadcast %7 : vector<8x1xf32> to vector<8x32xf32>
    %9 = arith.subf %1, %8 : vector<8x32xf32>
    %10 = arith.mulf %9, %9 : vector<8x32xf32>
    %cst_6 = arith.constant dense<0.000000e+00> : vector<8xf32>
    %11 = vector.multi_reduction <add>, %10, %cst_6 [1] : vector<8x32xf32> to vector<8xf32>
    %12 = vector.shape_cast %11 : vector<8xf32> to vector<8x1xf32>
    %cst_7 = arith.constant 3.200000e+01 : f32
    %13 = vector.broadcast %cst_7 : f32 to vector<8x1xf32>
    %14 = arith.divf %12, %13 : vector<8x1xf32>
    %15 = vector.broadcast %7 : vector<8x1xf32> to vector<8x32xf32>
    %16 = arith.subf %1, %15 : vector<8x32xf32>
    %cst_8 = arith.constant 9.99999974E-6 : f32
    %17 = vector.broadcast %cst_8 : f32 to vector<8x1xf32>
    %18 = arith.addf %14, %17 : vector<8x1xf32>
    %19 = math.rsqrt %18 : vector<8x1xf32>
    %20 = vector.broadcast %19 : vector<8x1xf32> to vector<8x32xf32>
    %21 = arith.mulf %16, %20 : vector<8x32xf32>
    %22 = vector.broadcast %2 : vector<1x32xf32> to vector<8x32xf32>
    %23 = arith.mulf %21, %22 : vector<8x32xf32>
    %24 = vector.broadcast %3 : vector<1x32xf32> to vector<8x32xf32>
    %25 = arith.addf %23, %24 : vector<8x32xf32>
    %c0_9 = arith.constant 0 : index
    %c0_10 = arith.constant 0 : index
    %26 = vector.load %arg5[%c0_9, %c0_10] : memref<32x96xf32, #tpu.memory_space<vmem>>, vector<32x96xf32>
    %cst_11 = arith.constant dense<0.000000e+00> : vector<8x96xf32>
    %27 = tpu.matmul %25, %26, %cst_11 {dimension_numbers = #tpu.dot_dimension_numbers<[1], [0], [0], [1], [0, 0, 1, 1], [], []>} : vector<8x32xf32>, vector<32x96xf32>, vector<8x96xf32> -> vector<8x96xf32>
    %c0_12 = arith.constant 0 : index
    %c0_13 = arith.constant 0 : index
    %28 = vector.load %arg6[%c0_12, %c0_13] : memref<1x96xf32, #tpu.memory_space<vmem>>, vector<1x96xf32>
    %29 = vector.broadcast %28 : vector<1x96xf32> to vector<8x96xf32>
    %30 = arith.addf %27, %29 : vector<8x96xf32>
    %31 = vector.shape_cast %30 : vector<8x96xf32> to vector<1x8x96xf32>
    %cst_14 = arith.constant 0.000000e+00 : f32
    %32 = vector.broadcast %cst_14 : f32 to vector<8x32xf32>
    %33 = vector.extract_strided_slice %31 {offsets = [0, 0, 0], sizes = [1, 8, 16], strides = [1, 1, 1]} : vector<1x8x96xf32> to vector<1x8x16xf32>
    %34 = vector.extract_strided_slice %31 {offsets = [0, 0, 32], sizes = [1, 8, 16], strides = [1, 1, 1]} : vector<1x8x96xf32> to vector<1x8x16xf32>
    %35 = vector.extract_strided_slice %31 {offsets = [0, 0, 64], sizes = [1, 8, 16], strides = [1, 1, 1]} : vector<1x8x96xf32> to vector<1x8x16xf32>
    "tpu.trace_start"() <{level = 10 : i32, message = "bnd,bmd->bnm"}> : () -> ()
    %cst_15 = arith.constant dense<0.000000e+00> : vector<1x8x8xf32>
    %36 = tpu.matmul %33, %34, %cst_15 {dimension_numbers = #tpu.dot_dimension_numbers<[2], [2], [1], [1], [0, 0, 0, 1, 1, 1], [0], [0]>} : vector<1x8x16xf32>, vector<1x8x16xf32>, vector<1x8x8xf32> -> vector<1x8x8xf32>
    "tpu.trace_stop"() : () -> ()
    %cst_16 = arith.constant 2.500000e-01 : f32
    %37 = vector.broadcast %cst_16 : f32 to vector<1x8x8xf32>
    %38 = arith.mulf %36, %37 : vector<1x8x8xf32>
    %cst_17 = arith.constant dense<0xFF800000> : vector<1x8xf32>
    %39 = vector.multi_reduction <maximumf>, %38, %cst_17 [2] : vector<1x8x8xf32> to vector<1x8xf32>
    %40 = vector.shape_cast %39 : vector<1x8xf32> to vector<1x8x1xf32>
    %41 = vector.broadcast %40 : vector<1x8x1xf32> to vector<1x8x8xf32>
    %42 = arith.subf %38, %41 : vector<1x8x8xf32>
    %43 = math.exp %42 : vector<1x8x8xf32>
    %cst_18 = arith.constant dense<0.000000e+00> : vector<1x8xf32>
    %44 = vector.multi_reduction <add>, %43, %cst_18 [2] : vector<1x8x8xf32> to vector<1x8xf32>
    %45 = vector.shape_cast %44 : vector<1x8xf32> to vector<1x8x1xf32>
    %46 = tpu.reciprocal %45 {approx = true} : vector<1x8x1xf32> -> vector<1x8x1xf32>
    %47 = vector.broadcast %46 : vector<1x8x1xf32> to vector<1x8x8xf32>
    %48 = arith.mulf %43, %47 : vector<1x8x8xf32>
    "tpu.trace_start"() <{level = 10 : i32, message = "bnm,bmd->bnd"}> : () -> ()
    %cst_19 = arith.constant dense<0.000000e+00> : vector<1x8x16xf32>
    %49 = tpu.matmul %48, %35, %cst_19 {dimension_numbers = #tpu.dot_dimension_numbers<[2], [1], [1], [2], [0, 0, 0, 1, 1, 2], [0], [0]>} : vector<1x8x8xf32>, vector<1x8x16xf32>, vector<1x8x16xf32> -> vector<1x8x16xf32>
    "tpu.trace_stop"() : () -> ()
    %50 = vector.shape_cast %49 : vector<1x8x16xf32> to vector<8x16xf32>
    %c0_20 = arith.constant 0 : index
    %c0_21 = arith.constant 0 : index
    %c0_22 = arith.constant 0 : index
    %51 = vector.load %arg7[%c0_20, %c0_21, %c0_22] : memref<2x16x32xf32, #tpu.memory_space<vmem>>, vector<1x16x32xf32>
    %52 = vector.shape_cast %51 : vector<1x16x32xf32> to vector<16x32xf32>
    %cst_23 = arith.constant dense<0.000000e+00> : vector<8x32xf32>
    %53 = tpu.matmul %50, %52, %cst_23 {dimension_numbers = #tpu.dot_dimension_numbers<[1], [0], [0], [1], [0, 0, 1, 1], [], []>} : vector<8x16xf32>, vector<16x32xf32>, vector<8x32xf32> -> vector<8x32xf32>
    %54 = arith.addf %32, %53 : vector<8x32xf32>
    %55 = vector.extract_strided_slice %31 {offsets = [0, 0, 16], sizes = [1, 8, 16], strides = [1, 1, 1]} : vector<1x8x96xf32> to vector<1x8x16xf32>
    %56 = vector.extract_strided_slice %31 {offsets = [0, 0, 48], sizes = [1, 8, 16], strides = [1, 1, 1]} : vector<1x8x96xf32> to vector<1x8x16xf32>
    %57 = vector.extract_strided_slice %31 {offsets = [0, 0, 80], sizes = [1, 8, 16], strides = [1, 1, 1]} : vector<1x8x96xf32> to vector<1x8x16xf32>
    "tpu.trace_start"() <{level = 10 : i32, message = "bnd,bmd->bnm"}> : () -> ()
    %cst_24 = arith.constant dense<0.000000e+00> : vector<1x8x8xf32>
    %58 = tpu.matmul %55, %56, %cst_24 {dimension_numbers = #tpu.dot_dimension_numbers<[2], [2], [1], [1], [0, 0, 0, 1, 1, 1], [0], [0]>} : vector<1x8x16xf32>, vector<1x8x16xf32>, vector<1x8x8xf32> -> vector<1x8x8xf32>
    "tpu.trace_stop"() : () -> ()
    %cst_25 = arith.constant 2.500000e-01 : f32
    %59 = vector.broadcast %cst_25 : f32 to vector<1x8x8xf32>
    %60 = arith.mulf %58, %59 : vector<1x8x8xf32>
    %cst_26 = arith.constant dense<0xFF800000> : vector<1x8xf32>
    %61 = vector.multi_reduction <maximumf>, %60, %cst_26 [2] : vector<1x8x8xf32> to vector<1x8xf32>
    %62 = vector.shape_cast %61 : vector<1x8xf32> to vector<1x8x1xf32>
    %63 = vector.broadcast %62 : vector<1x8x1xf32> to vector<1x8x8xf32>
    %64 = arith.subf %60, %63 : vector<1x8x8xf32>
    %65 = math.exp %64 : vector<1x8x8xf32>
    %cst_27 = arith.constant dense<0.000000e+00> : vector<1x8xf32>
    %66 = vector.multi_reduction <add>, %65, %cst_27 [2] : vector<1x8x8xf32> to vector<1x8xf32>
    %67 = vector.shape_cast %66 : vector<1x8xf32> to vector<1x8x1xf32>
    %68 = tpu.reciprocal %67 {approx = true} : vector<1x8x1xf32> -> vector<1x8x1xf32>
    %69 = vector.broadcast %68 : vector<1x8x1xf32> to vector<1x8x8xf32>
    %70 = arith.mulf %65, %69 : vector<1x8x8xf32>
    "tpu.trace_start"() <{level = 10 : i32, message = "bnm,bmd->bnd"}> : () -> ()
    %cst_28 = arith.constant dense<0.000000e+00> : vector<1x8x16xf32>
    %71 = tpu.matmul %70, %57, %cst_28 {dimension_numbers = #tpu.dot_dimension_numbers<[2], [1], [1], [2], [0, 0, 0, 1, 1, 2], [0], [0]>} : vector<1x8x8xf32>, vector<1x8x16xf32>, vector<1x8x16xf32> -> vector<1x8x16xf32>
    "tpu.trace_stop"() : () -> ()
    %72 = vector.shape_cast %71 : vector<1x8x16xf32> to vector<8x16xf32>
    %c1_29 = arith.constant 1 : index
    %c0_30 = arith.constant 0 : index
    %c0_31 = arith.constant 0 : index
    %73 = vector.load %arg7[%c1_29, %c0_30, %c0_31] : memref<2x16x32xf32, #tpu.memory_space<vmem>>, vector<1x16x32xf32>
    %74 = vector.shape_cast %73 : vector<1x16x32xf32> to vector<16x32xf32>
    %cst_32 = arith.constant dense<0.000000e+00> : vector<8x32xf32>
    %75 = tpu.matmul %72, %74, %cst_32 {dimension_numbers = #tpu.dot_dimension_numbers<[1], [0], [0], [1], [0, 0, 1, 1], [], []>} : vector<8x16xf32>, vector<16x32xf32>, vector<8x32xf32> -> vector<8x32xf32>
    %76 = arith.addf %54, %75 : vector<8x32xf32>
    %77 = arith.addf %1, %76 : vector<8x32xf32>
    %c0_33 = arith.constant 0 : index
    %c0_34 = arith.constant 0 : index
    %78 = vector.load %arg8[%c0_33, %c0_34] : memref<1x32xf32, #tpu.memory_space<vmem>>, vector<1x32xf32>
    %79 = vector.broadcast %78 : vector<1x32xf32> to vector<8x32xf32>
    %80 = arith.addf %77, %79 : vector<8x32xf32>
    %c2 = arith.constant 2 : index
    %c0_35 = arith.constant 0 : index
    %81 = vector.load %arg4[%c2, %c0_35] : memref<4x32xf32, #tpu.memory_space<vmem>>, vector<1x32xf32>
    %c3 = arith.constant 3 : index
    %c0_36 = arith.constant 0 : index
    %82 = vector.load %arg4[%c3, %c0_36] : memref<4x32xf32, #tpu.memory_space<vmem>>, vector<1x32xf32>
    %cst_37 = arith.constant dense<0.000000e+00> : vector<8xf32>
    %83 = vector.multi_reduction <add>, %80, %cst_37 [1] : vector<8x32xf32> to vector<8xf32>
    %84 = vector.shape_cast %83 : vector<8xf32> to vector<8x1xf32>
    %cst_38 = arith.constant 3.200000e+01 : f32
    %85 = vector.broadcast %cst_38 : f32 to vector<8x1xf32>
    %86 = arith.divf %84, %85 : vector<8x1xf32>
    %87 = vector.broadcast %86 : vector<8x1xf32> to vector<8x32xf32>
    %88 = arith.subf %80, %87 : vector<8x32xf32>
    %89 = arith.mulf %88, %88 : vector<8x32xf32>
    %cst_39 = arith.constant dense<0.000000e+00> : vector<8xf32>
    %90 = vector.multi_reduction <add>, %89, %cst_39 [1] : vector<8x32xf32> to vector<8xf32>
    %91 = vector.shape_cast %90 : vector<8xf32> to vector<8x1xf32>
    %cst_40 = arith.constant 3.200000e+01 : f32
    %92 = vector.broadcast %cst_40 : f32 to vector<8x1xf32>
    %93 = arith.divf %91, %92 : vector<8x1xf32>
    %94 = vector.broadcast %86 : vector<8x1xf32> to vector<8x32xf32>
    %95 = arith.subf %80, %94 : vector<8x32xf32>
    %cst_41 = arith.constant 9.99999974E-6 : f32
    %96 = vector.broadcast %cst_41 : f32 to vector<8x1xf32>
    %97 = arith.addf %93, %96 : vector<8x1xf32>
    %98 = math.rsqrt %97 : vector<8x1xf32>
    %99 = vector.broadcast %98 : vector<8x1xf32> to vector<8x32xf32>
    %100 = arith.mulf %95, %99 : vector<8x32xf32>
    %101 = vector.broadcast %81 : vector<1x32xf32> to vector<8x32xf32>
    %102 = arith.mulf %100, %101 : vector<8x32xf32>
    %103 = vector.broadcast %82 : vector<1x32xf32> to vector<8x32xf32>
    %104 = arith.addf %102, %103 : vector<8x32xf32>
    %c0_42 = arith.constant 0 : index
    %c0_43 = arith.constant 0 : index
    %105 = vector.load %arg9[%c0_42, %c0_43] : memref<32x64xf32, #tpu.memory_space<vmem>>, vector<32x64xf32>
    %cst_44 = arith.constant dense<0.000000e+00> : vector<8x64xf32>
    %106 = tpu.matmul %104, %105, %cst_44 {dimension_numbers = #tpu.dot_dimension_numbers<[1], [0], [0], [1], [0, 0, 1, 1], [], []>} : vector<8x32xf32>, vector<32x64xf32>, vector<8x64xf32> -> vector<8x64xf32>
    %c0_45 = arith.constant 0 : index
    %c0_46 = arith.constant 0 : index
    %107 = vector.load %arg10[%c0_45, %c0_46] : memref<1x64xf32, #tpu.memory_space<vmem>>, vector<1x64xf32>
    %108 = vector.broadcast %107 : vector<1x64xf32> to vector<8x64xf32>
    %109 = arith.addf %106, %108 : vector<8x64xf32>
    %cst_47 = arith.constant 0.000000e+00 : f32
    %110 = vector.broadcast %cst_47 : f32 to vector<8x64xf32>
    %111 = arith.maximumf %109, %110 : vector<8x64xf32>
    %c0_48 = arith.constant 0 : index
    %c0_49 = arith.constant 0 : index
    %112 = vector.load %arg11[%c0_48, %c0_49] : memref<64x32xf32, #tpu.memory_space<vmem>>, vector<64x32xf32>
    %cst_50 = arith.constant dense<0.000000e+00> : vector<8x32xf32>
    %113 = tpu.matmul %111, %112, %cst_50 {dimension_numbers = #tpu.dot_dimension_numbers<[1], [0], [0], [1], [0, 0, 1, 1], [], []>} : vector<8x64xf32>, vector<64x32xf32>, vector<8x32xf32> -> vector<8x32xf32>
    %114 = arith.addf %80, %113 : vector<8x32xf32>
    %c0_51 = arith.constant 0 : index
    %c0_52 = arith.constant 0 : index
    %115 = vector.load %arg12[%c0_51, %c0_52] : memref<1x32xf32, #tpu.memory_space<vmem>>, vector<1x32xf32>
    %116 = vector.broadcast %115 : vector<1x32xf32> to vector<8x32xf32>
    %117 = arith.addf %114, %116 : vector<8x32xf32>
    %c0_53 = arith.constant 0 : index
    %c0_54 = arith.constant 0 : index
    %118 = vector.load %arg13[%c0_53, %c0_54] : memref<32x32xf32, #tpu.memory_space<vmem>>, vector<32x32xf32>
    %cst_55 = arith.constant dense<0.000000e+00> : vector<8x32xf32>
    %119 = tpu.matmul %117, %118, %cst_55 {dimension_numbers = #tpu.dot_dimension_numbers<[1], [0], [0], [1], [0, 0, 1, 1], [], []>} : vector<8x32xf32>, vector<32x32xf32>, vector<8x32xf32> -> vector<8x32xf32>
    %c0_56 = arith.constant 0 : index
    %c0_57 = arith.constant 0 : index
    %120 = vector.load %arg14[%c0_56, %c0_57] : memref<1x32xf32, #tpu.memory_space<vmem>>, vector<1x32xf32>
    %121 = vector.broadcast %120 : vector<1x32xf32> to vector<8x32xf32>
    %122 = arith.addf %119, %121 : vector<8x32xf32>
    %123 = tpu.iota {dimensions = array<i32: 0>} : vector<1x8xi32>
    %124 = tpu.iota {dimensions = array<i32: 1>} : vector<1x8xi32>
    %c8_i32 = arith.constant 8 : i32
    %125 = vector.broadcast %c8_i32 : i32 to vector<1x8xi32>
    %126 = arith.muli %123, %125 : vector<1x8xi32>
    %127 = arith.cmpi sge, %124, %126 : vector<1x8xi32>
    %c1_i32 = arith.constant 1 : i32
    %128 = vector.broadcast %c1_i32 : i32 to vector<1x8xi32>
    %129 = arith.addi %123, %128 : vector<1x8xi32>
    %c8_i32_58 = arith.constant 8 : i32
    %130 = vector.broadcast %c8_i32_58 : i32 to vector<1x8xi32>
    %131 = arith.muli %129, %130 : vector<1x8xi32>
    %132 = arith.cmpi slt, %124, %131 : vector<1x8xi32>
    %133 = arith.andi %127, %132 : vector<1x8xi1>
    %cst_59 = arith.constant 1.000000e+00 : f32
    %cst_60 = arith.constant 0.000000e+00 : f32
    %134 = vector.broadcast %cst_59 : f32 to vector<1x8xf32>
    %135 = vector.broadcast %cst_60 : f32 to vector<1x8xf32>
    %136 = arith.select %133, %134, %135 : vector<1x8xi1>, vector<1x8xf32>
    %cst_61 = arith.constant dense<0.000000e+00> : vector<1x32xf32>
    %137 = tpu.matmul %136, %122, %cst_61 {dimension_numbers = #tpu.dot_dimension_numbers<[1], [0], [0], [1], [0, 0, 1, 1], [], []>} : vector<1x8xf32>, vector<8x32xf32>, vector<1x32xf32> -> vector<1x32xf32>
    %138 = arith.mulf %122, %122 : vector<8x32xf32>
    %cst_62 = arith.constant dense<0.000000e+00> : vector<1x32xf32>
    %139 = tpu.matmul %136, %138, %cst_62 {dimension_numbers = #tpu.dot_dimension_numbers<[1], [0], [0], [1], [0, 0, 1, 1], [], []>} : vector<1x8xf32>, vector<8x32xf32>, vector<1x32xf32> -> vector<1x32xf32>
    %c0_63 = arith.constant 0 : index
    %c0_64 = arith.constant 0 : index
    %c0_65 = arith.constant 0 : index
    %140 = vector.load %arg2[%c0_63, %c0_64, %c0_65] : memref<1x1x32xf32, #tpu.memory_space<vmem>>, vector<1x1x32xf32>
    %141 = vector.shape_cast %140 : vector<1x1x32xf32> to vector<1x32xf32>
    %cst_66 = arith.constant 1.250000e-01 : f32
    %142 = vector.broadcast %cst_66 : f32 to vector<1x32xf32>
    %143 = arith.mulf %137, %142 : vector<1x32xf32>
    %144 = arith.mulf %143, %141 : vector<1x32xf32>
    %145 = arith.mulf %141, %141 : vector<1x32xf32>
    %146 = arith.mulf %139, %145 : vector<1x32xf32>
    %cst_67 = arith.constant dense<0.000000e+00> : vector<1xf32>
    %147 = vector.multi_reduction <add>, %146, %cst_67 [1] : vector<1x32xf32> to vector<1xf32>
    %148 = vector.shape_cast %147 : vector<1xf32> to vector<1x1xf32>
    %c0_68 = arith.constant 0 : index
    %c0_69 = arith.constant 0 : index
    %c0_70 = arith.constant 0 : index
    %149 = vector.load %arg3[%c0_68, %c0_69, %c0_70] : memref<1x1x32xf32, #tpu.memory_space<vmem>>, vector<1x1x32xf32>
    %150 = vector.shape_cast %149 : vector<1x1x32xf32> to vector<1x32xf32>
    %c0_71 = arith.constant 0 : index
    %c0_72 = arith.constant 0 : index
    %151 = vector.load %arg15[%c0_71, %c0_72] : memref<32x4xf32, #tpu.memory_space<vmem>>, vector<32x4xf32>
    %cst_73 = arith.constant dense<0.000000e+00> : vector<1x4xf32>
    %152 = tpu.matmul %150, %151, %cst_73 {dimension_numbers = #tpu.dot_dimension_numbers<[1], [0], [0], [1], [0, 0, 1, 1], [], []>} : vector<1x32xf32>, vector<32x4xf32>, vector<1x4xf32> -> vector<1x4xf32>
    %c0_74 = arith.constant 0 : index
    %c0_75 = arith.constant 0 : index
    %153 = vector.load %arg16[%c0_74, %c0_75] : memref<32x4xf32, #tpu.memory_space<vmem>>, vector<32x4xf32>
    %cst_76 = arith.constant dense<0.000000e+00> : vector<1x4xf32>
    %154 = tpu.matmul %144, %153, %cst_76 {dimension_numbers = #tpu.dot_dimension_numbers<[1], [0], [0], [1], [0, 0, 1, 1], [], []>} : vector<1x32xf32>, vector<32x4xf32>, vector<1x4xf32> -> vector<1x4xf32>
    %155 = arith.addf %152, %154 : vector<1x4xf32>
    %c0_77 = arith.constant 0 : index
    %c0_78 = arith.constant 0 : index
    %156 = vector.load %arg17[%c0_77, %c0_78] : memref<1x4xf32, #tpu.memory_space<vmem>>, vector<1x4xf32>
    %157 = arith.addf %155, %156 : vector<1x4xf32>
    %c0_79 = arith.constant 0 : index
    %c0_80 = arith.constant 0 : index
    %158 = vector.load %arg18[%c0_79, %c0_80] : memref<32x16xf32, #tpu.memory_space<vmem>>, vector<32x16xf32>
    %cst_81 = arith.constant dense<0.000000e+00> : vector<1x16xf32>
    %159 = tpu.matmul %144, %158, %cst_81 {dimension_numbers = #tpu.dot_dimension_numbers<[1], [0], [0], [1], [0, 0, 1, 1], [], []>} : vector<1x32xf32>, vector<32x16xf32>, vector<1x16xf32> -> vector<1x16xf32>
    %c0_82 = arith.constant 0 : index
    %c0_83 = arith.constant 0 : index
    %160 = vector.load %arg19[%c0_82, %c0_83] : memref<1x16xf32, #tpu.memory_space<vmem>>, vector<1x16xf32>
    %161 = arith.addf %159, %160 : vector<1x16xf32>
    %c0_84 = arith.constant 0 : index
    %c0_85 = arith.constant 0 : index
    %c0_86 = arith.constant 0 : index
    %162 = vector.load %arg20[%c0_84, %c0_85, %c0_86] : memref<1x1x4xf32, #tpu.memory_space<vmem>>, vector<1x1x4xf32>
    %163 = vector.shape_cast %162 : vector<1x1x4xf32> to vector<1x4xf32>
    %164 = vector.shape_cast %157 : vector<1x4xf32> to vector<1x1x4xf32>
    tpu.vector_store %arg20[%c0_84, %c0_85, %c0_86], %164 {strides = array<i32>} : memref<1x1x4xf32, #tpu.memory_space<vmem>>, vector<1x1x4xf32>,
    %c0_87 = arith.constant 0 : index
    %c0_88 = arith.constant 0 : index
    %c0_89 = arith.constant 0 : index
    %165 = vector.load %arg21[%c0_87, %c0_88, %c0_89] : memref<1x1x16xf32, #tpu.memory_space<vmem>>, vector<1x1x16xf32>
    %166 = vector.shape_cast %165 : vector<1x1x16xf32> to vector<1x16xf32>
    %167 = vector.shape_cast %161 : vector<1x16xf32> to vector<1x1x16xf32>
    tpu.vector_store %arg21[%c0_87, %c0_88, %c0_89], %167 {strides = array<i32>} : memref<1x1x16xf32, #tpu.memory_space<vmem>>, vector<1x1x16xf32>,
    %c0_90 = arith.constant 0 : index
    %c0_91 = arith.constant 0 : index
    %c0_92 = arith.constant 0 : index
    %168 = vector.load %arg22[%c0_90, %c0_91, %c0_92] : memref<1x1x1xf32, #tpu.memory_space<vmem>>, vector<1x1x1xf32>
    %169 = vector.shape_cast %168 : vector<1x1x1xf32> to vector<1x1xf32>
    %170 = vector.shape_cast %148 : vector<1x1xf32> to vector<1x1x1xf32>
    tpu.vector_store %arg22[%c0_90, %c0_91, %c0_92], %170 {strides = array<i32>} : memref<1x1x1xf32, #tpu.memory_space<vmem>>, vector<1x1x1xf32>,
    return
  }
  func.func @transform_0(%arg0: i32) -> (i32, i32, i32) {
    %c0_i32 = arith.constant 0 : i32
    %c0_i32_0 = arith.constant 0 : i32
    %c0_i32_1 = arith.constant 0 : i32
    return %arg0, %c0_i32, %c0_i32_0 : i32, i32, i32
  }
  func.func @transform_1(%arg0: i32) -> (i32, i32, i32) {
    %c0_i32 = arith.constant 0 : i32
    %c0_i32_0 = arith.constant 0 : i32
    %c0_i32_1 = arith.constant 0 : i32
    return %arg0, %c0_i32, %c0_i32_0 : i32, i32, i32
  }
  func.func @transform_2(%arg0: i32) -> (i32, i32, i32) {
    %c0_i32 = arith.constant 0 : i32
    %c0_i32_0 = arith.constant 0 : i32
    %c0_i32_1 = arith.constant 0 : i32
    return %arg0, %c0_i32, %c0_i32_0 : i32, i32, i32
  }
  func.func @transform_3(%arg0: i32) -> (i32, i32) {
    %c0_i32 = arith.constant 0 : i32
    %c0_i32_0 = arith.constant 0 : i32
    %c0_i32_1 = arith.constant 0 : i32
    return %c0_i32, %c0_i32_0 : i32, i32
  }
  func.func @transform_4(%arg0: i32) -> (i32, i32) {
    %c0_i32 = arith.constant 0 : i32
    %c0_i32_0 = arith.constant 0 : i32
    %c0_i32_1 = arith.constant 0 : i32
    return %c0_i32, %c0_i32_0 : i32, i32
  }
  func.func @transform_5(%arg0: i32) -> (i32, i32) {
    %c0_i32 = arith.constant 0 : i32
    %c0_i32_0 = arith.constant 0 : i32
    %c0_i32_1 = arith.constant 0 : i32
    return %c0_i32, %c0_i32_0 : i32, i32
  }
  func.func @transform_6(%arg0: i32) -> (i32, i32, i32) {
    %c0_i32 = arith.constant 0 : i32
    %c0_i32_0 = arith.constant 0 : i32
    %c0_i32_1 = arith.constant 0 : i32
    %c0_i32_2 = arith.constant 0 : i32
    return %c0_i32, %c0_i32_0, %c0_i32_1 : i32, i32, i32
  }
  func.func @transform_7(%arg0: i32) -> (i32, i32) {
    %c0_i32 = arith.constant 0 : i32
    %c0_i32_0 = arith.constant 0 : i32
    %c0_i32_1 = arith.constant 0 : i32
    return %c0_i32, %c0_i32_0 : i32, i32
  }
  func.func @transform_8(%arg0: i32) -> (i32, i32) {
    %c0_i32 = arith.constant 0 : i32
    %c0_i32_0 = arith.constant 0 : i32
    %c0_i32_1 = arith.constant 0 : i32
    return %c0_i32, %c0_i32_0 : i32, i32
  }
  func.func @transform_9(%arg0: i32) -> (i32, i32) {
    %c0_i32 = arith.constant 0 : i32
    %c0_i32_0 = arith.constant 0 : i32
    %c0_i32_1 = arith.constant 0 : i32
    return %c0_i32, %c0_i32_0 : i32, i32
  }
  func.func @transform_10(%arg0: i32) -> (i32, i32) {
    %c0_i32 = arith.constant 0 : i32
    %c0_i32_0 = arith.constant 0 : i32
    %c0_i32_1 = arith.constant 0 : i32
    return %c0_i32, %c0_i32_0 : i32, i32
  }
  func.func @transform_11(%arg0: i32) -> (i32, i32) {
    %c0_i32 = arith.constant 0 : i32
    %c0_i32_0 = arith.constant 0 : i32
    %c0_i32_1 = arith.constant 0 : i32
    return %c0_i32, %c0_i32_0 : i32, i32
  }
  func.func @transform_12(%arg0: i32) -> (i32, i32) {
    %c0_i32 = arith.constant 0 : i32
    %c0_i32_0 = arith.constant 0 : i32
    %c0_i32_1 = arith.constant 0 : i32
    return %c0_i32, %c0_i32_0 : i32, i32
  }
  func.func @transform_13(%arg0: i32) -> (i32, i32) {
    %c0_i32 = arith.constant 0 : i32
    %c0_i32_0 = arith.constant 0 : i32
    %c0_i32_1 = arith.constant 0 : i32
    return %c0_i32, %c0_i32_0 : i32, i32
  }
  func.func @transform_14(%arg0: i32) -> (i32, i32) {
    %c0_i32 = arith.constant 0 : i32
    %c0_i32_0 = arith.constant 0 : i32
    %c0_i32_1 = arith.constant 0 : i32
    return %c0_i32, %c0_i32_0 : i32, i32
  }
  func.func @transform_15(%arg0: i32) -> (i32, i32) {
    %c0_i32 = arith.constant 0 : i32
    %c0_i32_0 = arith.constant 0 : i32
    %c0_i32_1 = arith.constant 0 : i32
    return %c0_i32, %c0_i32_0 : i32, i32
  }
  func.func @transform_16(%arg0: i32) -> (i32, i32) {
    %c0_i32 = arith.constant 0 : i32
    %c0_i32_0 = arith.constant 0 : i32
    %c0_i32_1 = arith.constant 0 : i32
    return %c0_i32, %c0_i32_0 : i32, i32
  }
  func.func @transform_17(%arg0: i32) -> (i32, i32) {
    %c0_i32 = arith.constant 0 : i32
    %c0_i32_0 = arith.constant 0 : i32
    %c0_i32_1 = arith.constant 0 : i32
    return %c0_i32, %c0_i32_0 : i32, i32
  }
  func.func @transform_18(%arg0: i32) -> (i32, i32) {
    %c0_i32 = arith.constant 0 : i32
    %c0_i32_0 = arith.constant 0 : i32
    %c0_i32_1 = arith.constant 0 : i32
    return %c0_i32, %c0_i32_0 : i32, i32
  }
  func.func @transform_19(%arg0: i32) -> (i32, i32, i32) {
    %c0_i32 = arith.constant 0 : i32
    %c0_i32_0 = arith.constant 0 : i32
    %c0_i32_1 = arith.constant 0 : i32
    return %arg0, %c0_i32, %c0_i32_0 : i32, i32, i32
  }
  func.func @transform_20(%arg0: i32) -> (i32, i32, i32) {
    %c0_i32 = arith.constant 0 : i32
    %c0_i32_0 = arith.constant 0 : i32
    %c0_i32_1 = arith.constant 0 : i32
    return %arg0, %c0_i32, %c0_i32_0 : i32, i32, i32
  }
  func.func @transform_21(%arg0: i32) -> (i32, i32, i32) {
    %c0_i32 = arith.constant 0 : i32
    %c0_i32_0 = arith.constant 0 : i32
    %c0_i32_1 = arith.constant 0 : i32
    return %arg0, %c0_i32, %c0_i32_0 : i32, i32, i32
  }
}

</mosaic_0001>

<llo_original>
// kernel: _lambda_.3
$region0: #{_lambda_.3}
  #allocation0 [shape = 'u32[]', space=smem, size = 0x4, offset = 0x4, fixed_abs, tag = 'smem constant byte address 0x4 - core index']
  #allocation1 [shape = 'u32[72,128]{1,0:T(1,128)}', space=vmem, size = 0x9000, scoped, tag = 'internal scratch']
  %s0 = inlined_call_operand.vmem [shape: f32[16,16], index: 0, kind: input, shape index: {}]
  %s1 = inlined_call_operand.vmem [shape: f32[16,1], index: 1, kind: input, shape index: {}]
  %s2 = inlined_call_operand.hbm [shape: f32[16,32], index: 2, kind: input, shape index: {}]
  %s3 = inlined_call_operand.vmem [shape: f32[1,32], index: 3, kind: input, shape index: {}]
  %s4 = inlined_call_operand.vmem [shape: f32[1,32], index: 4, kind: input, shape index: {}]
  %s5 = inlined_call_operand.vmem [shape: f32[1,32], index: 5, kind: input, shape index: {}]
  %s6 = inlined_call_operand.vmem [shape: f32[16,32], index: 6, kind: output, shape index: {}]
  %s7 = sld [smem:[#allocation0]]
  $region38: #{_lambda_.3} parent=0
    _
  %s9 = ssub.s32 1, %s7
  %s10 = scalar_select 0, %s9, %s7
  $region1: #{_lambda_.3} parent=0
    #allocation2 [shape = 'u8[8192]{0}', space=vmem, size = 0x2000, scoped, tag = 'input window, operand 2, single buffered']
    #allocation3 [shape = 's32[1]{0}', space=sflag, size = 0x4, scoped, tag = 'scoped memory for _lambda_.3']
    %11 = vsyncpa [#allocation3], 0
    // Predicated region
    $region2: #{_lambda_.3} parent=1 // pred_check
      _
    $region3: #{_lambda_.3} parent=1 // pred_check_branch
      %13 = sbr.rel (0) target = $region5
    $region4: #{_lambda_.3} parent=1 // pred_region
      _
    $region5: #{_lambda_.3} parent=1 // pred_fallthru
      _
    // Predicated region
    $region6: #{_lambda_.3} parent=1 // pred_check
      _
    $region7: #{_lambda_.3} parent=1 // pred_check_branch
      %15 = sbr.rel (0) target = $region9
    $region8: #{_lambda_.3} parent=1 // pred_region
      _
    $region9: #{_lambda_.3} parent=1 // pred_fallthru
      _
    // Predicated region
    $region10: #{_lambda_.3} parent=1 // pred_check
      _
    $region11: #{_lambda_.3} parent=1 // pred_check_branch
      %17 = sbr.rel (0) target = $region13
    $region12: #{_lambda_.3} parent=1 // pred_region
      %19 = vsyncadd [#allocation3], 0
      %s20 = sshll.u32 %s2, 4
      %s21 = int_to_ptr.hbm [resolvable:$true] %s20
      %s22 = sshll.u32 [#allocation2], 4
      %s23 = int_to_ptr.vmem [resolvable:$true] %s22
      %28 = dma.hbm_to_vmem [thread:$0]  %s21, 256, %s23, [#allocation3], 128, 128, 8
    $region13: #{_lambda_.3} parent=1 // pred_fallthru
      _
    // Predicated region
    $region14: #{_lambda_.3} parent=1 // pred_check
      _
    $region15: #{_lambda_.3} parent=1 // pred_check_branch
      %30 = sbr.rel (0) target = $region17
    $region16: #{_lambda_.3} parent=1 // pred_region
      _
    $region17: #{_lambda_.3} parent=1 // pred_fallthru
      _
    // Predicated region
    $region18: #{_lambda_.3} parent=1 // pred_check
      _
    $region19: #{_lambda_.3} parent=1 // pred_check_branch
      %32 = sbr.rel (0) target = $region21
    $region20: #{_lambda_.3} parent=1 // pred_region
      _
    $region21: #{_lambda_.3} parent=1 // pred_fallthru
      _
    // Predicated region
    $region22: #{_lambda_.3} parent=1 // pred_check
      _
    $region23: #{_lambda_.3} parent=1 // pred_check_branch
      %34 = sbr.rel (0) target = $region25
    $region24: #{_lambda_.3} parent=1 // pred_region
      _
    $region25: #{_lambda_.3} parent=1 // pred_fallthru
      _
    // Predicated region
    $region26: #{_lambda_.3} parent=1 // pred_check
      _
    $region27: #{_lambda_.3} parent=1 // pred_check_branch
      %36 = sbr.rel (0) target = $region29
    $region28: #{_lambda_.3} parent=1 // pred_region
      %38 = dma.done [#allocation3], 256
    $region29: #{_lambda_.3} parent=1 // pred_fallthru
      _
    %v39 = vld [vmem:[%s0] sm:$0xff]
    %v40 = vld [vmem:[%s0 + $0x8] sm:$0xff]
    %v41 = vld [vmem:[#allocation2] sm:$0xff]
    %v42 = vld [vmem:[#allocation2 + $0x8] sm:$0xff]
    %v43 = vld [vmem:[%s3] sm:$0x1]
    %v45 = vperm.slane %v43, 0
    %vm47 = vcmask 130048
    %v49 = vsel %vm47, %v39, 0
    %v52 = vsel %vm47, %v40, 0
    %54 = vmatpush.msra.mxu0 0.0
    %55 = vmatpush.msra.mxu0 0.0
    %56 = vmatpush.msra.mxu0 0.0
    %57 = vmatpush.msra.mxu0 0.0
    %58 = vmatpush.msra.mxu0 0.0
    %59 = vmatpush.msra.mxu0 0.0
    %60 = vmatpush.msra.mxu0 0.0
    %61 = vmatpush.msra.mxu0 0.0
    %62 = vmatpush.msra.mxu0 0.0
    %63 = vmatpush.msra.mxu0 0.0
    %64 = vmatpush.msra.mxu0 0.0
    %65 = vmatpush.msra.mxu0 0.0
    %66 = vmatpush.msra.mxu0 0.0
    %67 = vmatpush.msra.mxu0 0.0
    %68 = vmatpush.msra.mxu0 %v42
    %69 = vmatpush.msra.mxu0 %v41
    %70 = vmatmul.f32.gmra.mxu0 %v49
    %v71 = vpop.f32.mrf.mxu0
    %v72 = vadd.f32 %v45, %v71
    %73 = vmatmul.f32.gmra.mxu0 %v52
    %v74 = vpop.f32.mrf.mxu0
    %v75 = vadd.f32 %v45, %v74
    %76 = vdwg.mxu0
    %v77 = vmax.f32 %v72, 0.0
    %v78 = vmax.f32 %v75, 0.0
    %v79 = vld [vmem:[%s1] sm:$0xff]
    %v80 = vld [vmem:[%s1 + $0x8] sm:$0xff]
    %v81 = vld [vmem:[%s4] sm:$0x1]
    %83 = vset.pattern.permute.xlu0 0
    %84 = vperm.xlu0 %83, %v79
    %v85 = vpop.permute.xlu0 %84
    %88 = vset.pattern.permute.xlu0 0
    %89 = vperm.xlu0 %88, %v80
    %v90 = vpop.permute.xlu0 %89
    %v93 = vperm.slane %v81, 0
    %v95 = vmul.f32 %v85, %v93
    %v96 = vmul.f32 %v90, %v93
    %v97 = vld [vmem:[%s5] sm:$0x1]
    %v99 = vperm.slane %v97, 0
    %v101 = vadd.f32 %v95, %v99
    %v102 = vadd.f32 %v96, %v99
    %v103 = vmax.f32 %v101, 0.0
    %v104 = vmax.f32 %v102, 0.0
    %v105 = vadd.f32 %v77, %v103
    %v106 = vadd.f32 %v78, %v104
    %vm107 = vcmask 261120
    %108 = vst.msk [vmem:[%s6] sm:$0xff] %vm107, %v105
    %109 = vst.msk [vmem:[%s6 + $0x8] sm:$0xff] %vm107, %v106
    // Predicated region
    $region30: #{_lambda_.3} parent=1 // pred_check
      _
    $region31: #{_lambda_.3} parent=1 // pred_check_branch
      %111 = sbr.rel (0) target = $region33
    $region32: #{_lambda_.3} parent=1 // pred_region
      _
    $region33: #{_lambda_.3} parent=1 // pred_fallthru
      _
    // Predicated region
    $region34: #{_lambda_.3} parent=1 // pred_check
      _
    $region35: #{_lambda_.3} parent=1 // pred_check_branch
      %113 = sbr.rel (0) target = $region37
    $region36: #{_lambda_.3} parent=1 // pred_region
      _
    $region37: #{_lambda_.3} parent=1 // pred_fallthru
      _
    %114 = vsyncpa [#allocation3], 1

// kernel: _lambda_.4
$region0: #{_lambda_.4}
  #allocation0 [shape = 'u32[]', space=smem, size = 0x4, offset = 0x4, fixed_abs, tag = 'smem constant byte address 0x4 - core index']
  #allocation1 [shape = 'u32[72,128]{1,0:T(1,128)}', space=vmem, size = 0x9000, scoped, tag = 'internal scratch']
  %s0 = inlined_call_operand.vmem [shape: f32[2,16], index: 0, kind: input, shape index: {}]
  %s1 = inlined_call_operand.vmem [shape: f32[2,4], index: 1, kind: input, shape index: {}]
  %s2 = inlined_call_operand.vmem [shape: f32[16,32], index: 2, kind: input, shape index: {}]
  %s3 = inlined_call_operand.vmem [shape: f32[1,32], index: 3, kind: input, shape index: {}]
  %s4 = inlined_call_operand.vmem [shape: f32[32,16], index: 4, kind: input, shape index: {}]
  %s5 = inlined_call_operand.vmem [shape: f32[1,16], index: 5, kind: input, shape index: {}]
  %s6 = inlined_call_operand.vmem [shape: f32[4,32], index: 6, kind: input, shape index: {}]
  %s7 = inlined_call_operand.vmem [shape: f32[1,32], index: 7, kind: input, shape index: {}]
  %s8 = inlined_call_operand.vmem [shape: f32[2,32], index: 8, kind: output, shape index: {0}]
  %s9 = inlined_call_operand.vmem [shape: f32[2,16], index: 9, kind: output, shape index: {1}]
  %s10 = inlined_call_operand.vmem [shape: f32[2,32], index: 10, kind: output, shape index: {2}]
  %11 = xla_tuple %s8, %s9, %s10
  %s12 = sld [smem:[#allocation0]]
  $region58: #{_lambda_.4} parent=0
    _
  %s14 = ssub.s32 1, %s12
  %s15 = scalar_select 0, %s14, %s12
  // Predicated region
  $region2: #{_lambda_.4} parent=0 // pred_check
    _
  $region3: #{_lambda_.4} parent=0 // pred_check_branch
    %17 = sbr.rel (0) target = $region5
  $region4: #{_lambda_.4} parent=0 // pred_region
    _
  $region5: #{_lambda_.4} parent=0 // pred_fallthru
    _
  // Predicated region
  $region6: #{_lambda_.4} parent=0 // pred_check
    _
  $region7: #{_lambda_.4} parent=0 // pred_check_branch
    %19 = sbr.rel (0) target = $region9
  $region8: #{_lambda_.4} parent=0 // pred_region
    _
  $region9: #{_lambda_.4} parent=0 // pred_fallthru
    _
  // Predicated region
  $region10: #{_lambda_.4} parent=0 // pred_check
    _
  $region11: #{_lambda_.4} parent=0 // pred_check_branch
    %21 = sbr.rel (0) target = $region13
  $region12: #{_lambda_.4} parent=0 // pred_region
    _
  $region13: #{_lambda_.4} parent=0 // pred_fallthru
    _
  // Predicated region
  $region14: #{_lambda_.4} parent=0 // pred_check
    _
  $region15: #{_lambda_.4} parent=0 // pred_check_branch
    %23 = sbr.rel (0) target = $region17
  $region16: #{_lambda_.4} parent=0 // pred_region
    _
  $region17: #{_lambda_.4} parent=0 // pred_fallthru
    _
  // Predicated region
  $region18: #{_lambda_.4} parent=0 // pred_check
    _
  $region19: #{_lambda_.4} parent=0 // pred_check_branch
    %25 = sbr.rel (0) target = $region21
  $region20: #{_lambda_.4} parent=0 // pred_region
    _
  $region21: #{_lambda_.4} parent=0 // pred_fallthru
    _
  // Predicated region
  $region22: #{_lambda_.4} parent=0 // pred_check
    _
  $region23: #{_lambda_.4} parent=0 // pred_check_branch
    %27 = sbr.rel (0) target = $region25
  $region24: #{_lambda_.4} parent=0 // pred_region
    _
  $region25: #{_lambda_.4} parent=0 // pred_fallthru
    _
  // Predicated region
  $region26: #{_lambda_.4} parent=0 // pred_check
    _
  $region27: #{_lambda_.4} parent=0 // pred_check_branch
    %29 = sbr.rel (0) target = $region29
  $region28: #{_lambda_.4} parent=0 // pred_region
    _
  $region29: #{_lambda_.4} parent=0 // pred_fallthru
    _
  // Predicated region
  $region30: #{_lambda_.4} parent=0 // pred_check
    _
  $region31: #{_lambda_.4} parent=0 // pred_check_branch
    %31 = sbr.rel (0) target = $region33
  $region32: #{_lambda_.4} parent=0 // pred_region
    _
  $region33: #{_lambda_.4} parent=0 // pred_fallthru
    _
  %v32 = vld [vmem:[%s0] sm:$0x3]
  %v33 = vld [vmem:[%s2] sm:$0xff]
  %v34 = vld [vmem:[%s2 + $0x8] sm:$0xff]
  %v35 = vld [vmem:[%s3] sm:$0x1]
  %v37 = vperm.slane %v35, 0
  %vm39 = vcmask 130048
  %v41 = vsel %vm39, %v32, 0
  %43 = vmatpush.msra.mxu0 0.0
  %44 = vmatpush.msra.mxu0 0.0
  %45 = vmatpush.msra.mxu0 0.0
  %46 = vmatpush.msra.mxu0 0.0
  %47 = vmatpush.msra.mxu0 0.0
  %48 = vmatpush.msra.mxu0 0.0
  %49 = vmatpush.msra.mxu0 0.0
  %50 = vmatpush.msra.mxu0 0.0
  %51 = vmatpush.msra.mxu0 0.0
  %52 = vmatpush.msra.mxu0 0.0
  %53 = vmatpush.msra.mxu0 0.0
  %54 = vmatpush.msra.mxu0 0.0
  %55 = vmatpush.msra.mxu0 0.0
  %56 = vmatpush.msra.mxu0 0.0
  %57 = vmatpush.msra.mxu0 %v34
  %58 = vmatpush.msra.mxu0 %v33
  %59 = vmatmul.f32.gmra.mxu0 %v41
  %v60 = vpop.f32.mrf.mxu0
  %v61 = vadd.f32 %v37, %v60
  %62 = vdwg.mxu0
  %v63 = vmax.f32 %v61, 0.0
  %vm64 = vcmask 254976
  %65 = vst.msk [vmem:[%s8] sm:$0x3] %vm64, %v63
  %v66 = vld [vmem:[%s4] sm:$0xff]
  %v67 = vld [vmem:[%s4 + $0x8] sm:$0xff]
  %v68 = vld [vmem:[%s4 + $0x10] sm:$0xff]
  %v69 = vld [vmem:[%s4 + $0x18] sm:$0xff]
  %v70 = vld [vmem:[%s5] sm:$0x1]
  %v72 = vperm.slane %v70, 0
  %vm74 = vcmask 261120
  %v76 = vsel %vm74, %v63, 0
  %78 = vmatpush.msra.mxu0 0.0
  %79 = vmatpush.msra.mxu0 0.0
  %80 = vmatpush.msra.mxu0 0.0
  %81 = vmatpush.msra.mxu0 0.0
  %82 = vmatpush.msra.mxu0 0.0
  %83 = vmatpush.msra.mxu0 0.0
  %84 = vmatpush.msra.mxu0 0.0
  %85 = vmatpush.msra.mxu0 0.0
  %86 = vmatpush.msra.mxu0 0.0
  %87 = vmatpush.msra.mxu0 0.0
  %88 = vmatpush.msra.mxu0 0.0
  %89 = vmatpush.msra.mxu0 0.0
  %90 = vmatpush.msra.mxu0 %v69
  %91 = vmatpush.msra.mxu0 %v68
  %92 = vmatpush.msra.mxu0 %v67
  %93 = vmatpush.msra.mxu0 %v66
  %94 = vmatmul.f32.gmra.mxu0 %v76
  %v95 = vpop.f32.mrf.mxu0
  %v96 = vadd.f32 %v72, %v95
  %97 = vdwg.mxu0
  %vm98 = vcmask 123904
  %99 = vst.msk [vmem:[%s9] sm:$0x3] %vm98, %v96
  %v100 = vld [vmem:[%s1] sm:$0x3]
  %v101 = vld [vmem:[%s6] sm:$0xf]
  %v102 = vld [vmem:[%s7] sm:$0x1]
  %v104 = vperm.slane %v102, 0
  %vm106 = vcmask 31744
  %v108 = vsel %vm106, %v100, 0
  %vm110 = vcmask 1043456
  %v112 = vsel %vm110, %v101, 0
  %114 = vmatpush.msra.mxu0 0.0
  %115 = vmatpush.msra.mxu0 0.0
  %116 = vmatpush.msra.mxu0 0.0
  %117 = vmatpush.msra.mxu0 0.0
  %118 = vmatpush.msra.mxu0 0.0
  %119 = vmatpush.msra.mxu0 0.0
  %120 = vmatpush.msra.mxu0 0.0
  %121 = vmatpush.msra.mxu0 0.0
  %122 = vmatpush.msra.mxu0 0.0
  %123 = vmatpush.msra.mxu0 0.0
  %124 = vmatpush.msra.mxu0 0.0
  %125 = vmatpush.msra.mxu0 0.0
  %126 = vmatpush.msra.mxu0 0.0
  %127 = vmatpush.msra.mxu0 0.0
  %128 = vmatpush.msra.mxu0 0.0
  %129 = vmatpush.msra.mxu0 %v112
  %130 = vmatmul.f32.gmra.mxu0 %v108
  %v131 = vpop.f32.mrf.mxu0
  %v132 = vadd.f32 %v104, %v131
  %133 = vdwg.mxu0
  %v134 = vmax.f32 %v132, 0.0
  %135 = vst.msk [vmem:[%s10] sm:$0x3] %vm64, %v134
  // Predicated region
  $region34: #{_lambda_.4} parent=0 // pred_check
    _
  $region35: #{_lambda_.4} parent=0 // pred_check_branch
    %137 = sbr.rel (0) target = $region37
  $region36: #{_lambda_.4} parent=0 // pred_region
    _
  $region37: #{_lambda_.4} parent=0 // pred_fallthru
    _
  // Predicated region
  $region38: #{_lambda_.4} parent=0 // pred_check
    _
  $region39: #{_lambda_.4} parent=0 // pred_check_branch
    %139 = sbr.rel (0) target = $region41
  $region40: #{_lambda_.4} parent=0 // pred_region
    _
  $region41: #{_lambda_.4} parent=0 // pred_fallthru
    _
  // Predicated region
  $region42: #{_lambda_.4} parent=0 // pred_check
    _
  $region43: #{_lambda_.4} parent=0 // pred_check_branch
    %141 = sbr.rel (0) target = $region45
  $region44: #{_lambda_.4} parent=0 // pred_region
    _
  $region45: #{_lambda_.4} parent=0 // pred_fallthru
    _
  // Predicated region
  $region46: #{_lambda_.4} parent=0 // pred_check
    _
  $region47: #{_lambda_.4} parent=0 // pred_check_branch
    %143 = sbr.rel (0) target = $region49
  $region48: #{_lambda_.4} parent=0 // pred_region
    _
  $region49: #{_lambda_.4} parent=0 // pred_fallthru
    _
  // Predicated region
  $region50: #{_lambda_.4} parent=0 // pred_check
    _
  $region51: #{_lambda_.4} parent=0 // pred_check_branch
    %145 = sbr.rel (0) target = $region53
  $region52: #{_lambda_.4} parent=0 // pred_region
    _
  $region53: #{_lambda_.4} parent=0 // pred_fallthru
    _
  // Predicated region
  $region54: #{_lambda_.4} parent=0 // pred_check
    _
  $region55: #{_lambda_.4} parent=0 // pred_check_branch
    %147 = sbr.rel (0) target = $region57
  $region56: #{_lambda_.4} parent=0 // pred_region
    _
  $region57: #{_lambda_.4} parent=0 // pred_fallthru
    _

// kernel: _lambda_.5
$region0: #{_lambda_.5}
  #allocation0 [shape = 'u32[]', space=smem, size = 0x4, offset = 0x4, fixed_abs, tag = 'smem constant byte address 0x4 - core index']
  #allocation1 [shape = 'u32[72,128]{1,0:T(1,128)}', space=vmem, size = 0x9000, scoped, tag = 'internal scratch']
  %s0 = inlined_call_operand.vmem [shape: f32[2,8,32], index: 0, kind: input, shape index: {}]
  %s1 = inlined_call_operand.vmem [shape: f32[2,1,32], index: 1, kind: input, shape index: {}]
  %s2 = inlined_call_operand.vmem [shape: f32[2,1,32], index: 2, kind: input, shape index: {}]
  %s3 = inlined_call_operand.vmem [shape: f32[4,32], index: 3, kind: input, shape index: {}]
  %s4 = inlined_call_operand.vmem [shape: f32[32,96], index: 4, kind: input, shape index: {}]
  %s5 = inlined_call_operand.vmem [shape: f32[1,96], index: 5, kind: input, shape index: {}]
  %s6 = inlined_call_operand.vmem [shape: f32[2,16,32], index: 6, kind: input, shape index: {}]
  %s7 = inlined_call_operand.vmem [shape: f32[1,32], index: 7, kind: input, shape index: {}]
  %s8 = inlined_call_operand.vmem [shape: f32[32,64], index: 8, kind: input, shape index: {}]
  %s9 = inlined_call_operand.vmem [shape: f32[1,64], index: 9, kind: input, shape index: {}]
  %s10 = inlined_call_operand.vmem [shape: f32[64,32], index: 10, kind: input, shape index: {}]
  %s11 = inlined_call_operand.vmem [shape: f32[1,32], index: 11, kind: input, shape index: {}]
  %s12 = inlined_call_operand.vmem [shape: f32[32,32], index: 12, kind: input, shape index: {}]
  %s13 = inlined_call_operand.vmem [shape: f32[1,32], index: 13, kind: input, shape index: {}]
  %s14 = inlined_call_operand.vmem [shape: f32[32,4], index: 14, kind: input, shape index: {}]
  %s15 = inlined_call_operand.vmem [shape: f32[32,4], index: 15, kind: input, shape index: {}]
  %s16 = inlined_call_operand.vmem [shape: f32[1,4], index: 16, kind: input, shape index: {}]
  %s17 = inlined_call_operand.vmem [shape: f32[32,16], index: 17, kind: input, shape index: {}]
  %s18 = inlined_call_operand.vmem [shape: f32[1,16], index: 18, kind: input, shape index: {}]
  %s19 = inlined_call_operand.hbm [shape: f32[2,1,4], index: 19, kind: output, shape index: {0}]
  %s20 = inlined_call_operand.vmem [shape: f32[2,1,16], index: 20, kind: output, shape index: {1}]
  %s21 = inlined_call_operand.vmem [shape: f32[2,1,1], index: 21, kind: output, shape index: {2}]
  %22 = xla_tuple %s19, %s20, %s21
  %s23 = sld [smem:[#allocation0]]
  $region125: #{_lambda_.5} parent=0
    _
  %s25 = ssub.s32 1, %s23
  %s26 = scalar_select 0, %s25, %s23
  $region1: #{_lambda_.5} parent=0
    #allocation2 [shape = 'u8[1024]{0}', space=vmem, size = 0x400, scoped, tag = 'output window, operand 0']
    #allocation3 [shape = 's32[2]{0}', space=sflag, size = 0x8, scoped, tag = 'scoped memory for _lambda_.5']
    %27 = vsyncpa [#allocation3], 0
    %s28 = scalar_lea.sflag [#allocation3], 1
    %29 = vsyncpa %s28, 0
    loop: start=0, step=1, limit=4
    $region2: #{_lambda_.5} parent=1 // loop_pre_header
      _
    $region3: #{_lambda_.5} parent=1 // loop_header
      %s31 = sphi 0, %s35
      %p32 = scmp.ge.s32.totalorder %s31, 4
      %s41 = sphi 0, %s43
      %s44 = sphi 0, %s41
      %s45 = sphi 0, %s44
      %s61 = sphi 0, %s45
      %s67 = sphi 0, %s69
      %s70 = sphi 0, %s67
      %s71 = sphi 0, %s70
      %s87 = sphi 0, %s71
      %s93 = sphi 0, %s95
      %s96 = sphi 0, %s93
      %s97 = sphi 0, %s96
      %s113 = sphi 0, %s97
      %s117 = sphi 0, %s117
      %s119 = sphi 0, %s117
      %s120 = sphi 0, %s119
      %s134 = sphi 0, %s120
      %s138 = sphi 0, %s138
      %s140 = sphi 0, %s138
      %s141 = sphi 0, %s140
      %s155 = sphi 0, %s141
      %s159 = sphi 0, %s159
      %s161 = sphi 0, %s159
      %s162 = sphi 0, %s161
      %s176 = sphi 0, %s162
      %s180 = sphi 0, %s180
      %s182 = sphi 0, %s180
      %s183 = sphi 0, %s182
      %s197 = sphi 0, %s183
      %s201 = sphi 0, %s201
      %s203 = sphi 0, %s201
      %s204 = sphi 0, %s203
      %s218 = sphi 0, %s204
      %s222 = sphi 0, %s222
      %s224 = sphi 0, %s222
      %s225 = sphi 0, %s224
      %s239 = sphi 0, %s225
      %s243 = sphi 0, %s243
      %s245 = sphi 0, %s243
      %s246 = sphi 0, %s245
      %s260 = sphi 0, %s246
      %s264 = sphi 0, %s264
      %s266 = sphi 0, %s264
      %s267 = sphi 0, %s266
      %s281 = sphi 0, %s267
      %s285 = sphi 0, %s285
      %s287 = sphi 0, %s285
      %s288 = sphi 0, %s287
      %s302 = sphi 0, %s288
      %s306 = sphi 0, %s306
      %s308 = sphi 0, %s306
      %s309 = sphi 0, %s308
      %s323 = sphi 0, %s309
      %s327 = sphi 0, %s327
      %s329 = sphi 0, %s327
      %s330 = sphi 0, %s329
      %s344 = sphi 0, %s330
      %s348 = sphi 0, %s348
      %s350 = sphi 0, %s348
      %s351 = sphi 0, %s350
      %s365 = sphi 0, %s351
      %s369 = sphi 0, %s369
      %s371 = sphi 0, %s369
      %s372 = sphi 0, %s371
      %s386 = sphi 0, %s372
      %s390 = sphi 0, %s390
      %s392 = sphi 0, %s390
      %s393 = sphi 0, %s392
      %s407 = sphi 0, %s393
      %s411 = sphi 0, %s411
      %s413 = sphi 0, %s411
      %s414 = sphi 0, %s413
      %s428 = sphi 0, %s414
      %s432 = sphi 0, %s432
      %s434 = sphi 0, %s432
      %s435 = sphi 0, %s434
      %s449 = sphi 0, %s435
      %s455 = sphi 0, %s457
      %s458 = sphi 0, %s455
      %s459 = sphi 0, %s458
      %s475 = sphi 0, %s459
      %s481 = sphi 0, %s483
      %s484 = sphi 0, %s481
      %s485 = sphi 0, %s484
      %s501 = sphi 0, %s485
      %s507 = sphi 0, %s509
      %s510 = sphi 0, %s507
      %s511 = sphi 0, %s510
      %s527 = sphi 0, %s511
    $region4: #{_lambda_.5} parent=1 // loop_header_branch
      %34 = sbr.rel (%p32) target = $region8
    $region5: #{_lambda_.5} parent=1 // loop_body
      %s36 = ssub.s32 %s31, 1
      %s37 = ssub.s32 %s31, 2
      %s38 = sadd.s32 %s31, 1
      %s39 = ssub.s32 %s31, %s38
      %p40 = scmp.eq.s32.totalorder %s39, 0
      %s42 = sadd.s32 %s41, 1
      %s43 = scalar_select %p40, %s41, %s42
      %p46 = pneg %p40
      %p47 = scmp.eq.s32.totalorder %s31, 1
      %p48 = por %p46, %p47
      %p49 = scmp.ne.s32.totalorder %s41, %s44
      %p50 = scmp.eq.s32.totalorder %s31, 0
      %p51 = por %p49, %p50
      %p52 = scmp.ne.s32.totalorder %s41, %s44
      %p53 = scmp.eq.s32.totalorder %s36, 1
      %p54 = por %p52, %p53
      %p55 = scmp.ne.s32.totalorder %s44, %s45
      %p56 = scmp.eq.s32.totalorder %s36, 0
      %p57 = por %p55, %p56
      %p58 = scmp.ne.s32.totalorder %s44, %s45
      %p59 = scmp.eq.s32.totalorder %s37, 1
      %p60 = por %p58, %p59
      %p62 = scmp.ne.s32.totalorder %s45, %s61
      %p63 = scmp.eq.s32.totalorder %s37, 0
      %p64 = por %p62, %p63
      %s65 = ssub.s32 %s31, %s38
      %p66 = scmp.eq.s32.totalorder %s65, 0
      %s68 = sadd.s32 %s67, 1
      %s69 = scalar_select %p66, %s67, %s68
      %p72 = pneg %p66
      %p73 = scmp.eq.s32.totalorder %s31, 1
      %p74 = por %p72, %p73
      %p75 = scmp.ne.s32.totalorder %s67, %s70
      %p76 = scmp.eq.s32.totalorder %s31, 0
      %p77 = por %p75, %p76
      %p78 = scmp.ne.s32.totalorder %s67, %s70
      %p79 = scmp.eq.s32.totalorder %s36, 1
      %p80 = por %p78, %p79
      %p81 = scmp.ne.s32.totalorder %s70, %s71
      %p82 = scmp.eq.s32.totalorder %s36, 0
      %p83 = por %p81, %p82
      %p84 = scmp.ne.s32.totalorder %s70, %s71
      %p85 = scmp.eq.s32.totalorder %s37, 1
      %p86 = por %p84, %p85
      %p88 = scmp.ne.s32.totalorder %s71, %s87
      %p89 = scmp.eq.s32.totalorder %s37, 0
      %p90 = por %p88, %p89
      %s91 = ssub.s32 %s31, %s38
      %p92 = scmp.eq.s32.totalorder %s91, 0
      %s94 = sadd.s32 %s93, 1
      %s95 = scalar_select %p92, %s93, %s94
      %p98 = pneg %p92
      %p99 = scmp.eq.s32.totalorder %s31, 1
      %p100 = por %p98, %p99
      %p101 = scmp.ne.s32.totalorder %s93, %s96
      %p102 = scmp.eq.s32.totalorder %s31, 0
      %p103 = por %p101, %p102
      %p104 = scmp.ne.s32.totalorder %s93, %s96
      %p105 = scmp.eq.s32.totalorder %s36, 1
      %p106 = por %p104, %p105
      %p107 = scmp.ne.s32.totalorder %s96, %s97
      %p108 = scmp.eq.s32.totalorder %s36, 0
      %p109 = por %p107, %p108
      %p110 = scmp.ne.s32.totalorder %s96, %s97
      %p111 = scmp.eq.s32.totalorder %s37, 1
      %p112 = por %p110, %p111
      %p114 = scmp.ne.s32.totalorder %s97, %s113
      %p115 = scmp.eq.s32.totalorder %s37, 0
      %p116 = por %p114, %p115
      %s118 = sadd.s32 %s117, 1
      %p121 = scmp.eq.s32.totalorder %s31, 1
      %p122 = scmp.ne.s32.totalorder %s117, %s119
      %p123 = scmp.eq.s32.totalorder %s31, 0
      %p124 = por %p122, %p123
      %p125 = scmp.ne.s32.totalorder %s117, %s119
      %p126 = scmp.eq.s32.totalorder %s36, 1
      %p127 = por %p125, %p126
      %p128 = scmp.ne.s32.totalorder %s119, %s120
      %p129 = scmp.eq.s32.totalorder %s36, 0
      %p130 = por %p128, %p129
      %p131 = scmp.ne.s32.totalorder %s119, %s120
      %p132 = scmp.eq.s32.totalorder %s37, 1
      %p133 = por %p131, %p132
      %p135 = scmp.ne.s32.totalorder %s120, %s134
      %p136 = scmp.eq.s32.totalorder %s37, 0
      %p137 = por %p135, %p136
      %s139 = sadd.s32 %s138, 1
      %p142 = scmp.eq.s32.totalorder %s31, 1
      %p143 = scmp.ne.s32.totalorder %s138, %s140
      %p144 = scmp.eq.s32.totalorder %s31, 0
      %p145 = por %p143, %p144
      %p146 = scmp.ne.s32.totalorder %s138, %s140
      %p147 = scmp.eq.s32.totalorder %s36, 1
      %p148 = por %p146, %p147
      %p149 = scmp.ne.s32.totalorder %s140, %s141
      %p150 = scmp.eq.s32.totalorder %s36, 0
      %p151 = por %p149, %p150
      %p152 = scmp.ne.s32.totalorder %s140, %s141
      %p153 = scmp.eq.s32.totalorder %s37, 1
      %p154 = por %p152, %p153
      %p156 = scmp.ne.s32.totalorder %s141, %s155
      %p157 = scmp.eq.s32.totalorder %s37, 0
      %p158 = por %p156, %p157
      %s160 = sadd.s32 %s159, 1
      %p163 = scmp.eq.s32.totalorder %s31, 1
      %p164 = scmp.ne.s32.totalorder %s159, %s161
      %p165 = scmp.eq.s32.totalorder %s31, 0
      %p166 = por %p164, %p165
      %p167 = scmp.ne.s32.totalorder %s159, %s161
      %p168 = scmp.eq.s32.totalorder %s36, 1
      %p169 = por %p167, %p168
      %p170 = scmp.ne.s32.totalorder %s161, %s162
      %p171 = scmp.eq.s32.totalorder %s36, 0
      %p172 = por %p170, %p171
      %p173 = scmp.ne.s32.totalorder %s161, %s162
      %p174 = scmp.eq.s32.totalorder %s37, 1
      %p175 = por %p173, %p174
      %p177 = scmp.ne.s32.totalorder %s162, %s176
      %p178 = scmp.eq.s32.totalorder %s37, 0
      %p179 = por %p177, %p178
      %s181 = sadd.s32 %s180, 1
      %p184 = scmp.eq.s32.totalorder %s31, 1
      %p185 = scmp.ne.s32.totalorder %s180, %s182
      %p186 = scmp.eq.s32.totalorder %s31, 0
      %p187 = por %p185, %p186
      %p188 = scmp.ne.s32.totalorder %s180, %s182
      %p189 = scmp.eq.s32.totalorder %s36, 1
      %p190 = por %p188, %p189
      %p191 = scmp.ne.s32.totalorder %s182, %s183
      %p192 = scmp.eq.s32.totalorder %s36, 0
      %p193 = por %p191, %p192
      %p194 = scmp.ne.s32.totalorder %s182, %s183
      %p195 = scmp.eq.s32.totalorder %s37, 1
      %p196 = por %p194, %p195
      %p198 = scmp.ne.s32.totalorder %s183, %s197
      %p199 = scmp.eq.s32.totalorder %s37, 0
      %p200 = por %p198, %p199
      %s202 = sadd.s32 %s201, 1
      %p205 = scmp.eq.s32.totalorder %s31, 1
      %p206 = scmp.ne.s32.totalorder %s201, %s203
      %p207 = scmp.eq.s32.totalorder %s31, 0
      %p208 = por %p206, %p207
      %p209 = scmp.ne.s32.totalorder %s201, %s203
      %p210 = scmp.eq.s32.totalorder %s36, 1
      %p211 = por %p209, %p210
      %p212 = scmp.ne.s32.totalorder %s203, %s204
      %p213 = scmp.eq.s32.totalorder %s36, 0
      %p214 = por %p212, %p213
      %p215 = scmp.ne.s32.totalorder %s203, %s204
      %p216 = scmp.eq.s32.totalorder %s37, 1
      %p217 = por %p215, %p216
      %p219 = scmp.ne.s32.totalorder %s204, %s218
      %p220 = scmp.eq.s32.totalorder %s37, 0
      %p221 = por %p219, %p220
      %s223 = sadd.s32 %s222, 1
      %p226 = scmp.eq.s32.totalorder %s31, 1
      %p227 = scmp.ne.s32.totalorder %s222, %s224
      %p228 = scmp.eq.s32.totalorder %s31, 0
      %p229 = por %p227, %p228
      %p230 = scmp.ne.s32.totalorder %s222, %s224
      %p231 = scmp.eq.s32.totalorder %s36, 1
      %p232 = por %p230, %p231
      %p233 = scmp.ne.s32.totalorder %s224, %s225
      %p234 = scmp.eq.s32.totalorder %s36, 0
      %p235 = por %p233, %p234
      %p236 = scmp.ne.s32.totalorder %s224, %s225
      %p237 = scmp.eq.s32.totalorder %s37, 1
      %p238 = por %p236, %p237
      %p240 = scmp.ne.s32.totalorder %s225, %s239
      %p241 = scmp.eq.s32.totalorder %s37, 0
      %p242 = por %p240, %p241
      %s244 = sadd.s32 %s243, 1
      %p247 = scmp.eq.s32.totalorder %s31, 1
      %p248 = scmp.ne.s32.totalorder %s243, %s245
      %p249 = scmp.eq.s32.totalorder %s31, 0
      %p250 = por %p248, %p249
      %p251 = scmp.ne.s32.totalorder %s243, %s245
      %p252 = scmp.eq.s32.totalorder %s36, 1
      %p253 = por %p251, %p252
      %p254 = scmp.ne.s32.totalorder %s245, %s246
      %p255 = scmp.eq.s32.totalorder %s36, 0
      %p256 = por %p254, %p255
      %p257 = scmp.ne.s32.totalorder %s245, %s246
      %p258 = scmp.eq.s32.totalorder %s37, 1
      %p259 = por %p257, %p258
      %p261 = scmp.ne.s32.totalorder %s246, %s260
      %p262 = scmp.eq.s32.totalorder %s37, 0
      %p263 = por %p261, %p262
      %s265 = sadd.s32 %s264, 1
      %p268 = scmp.eq.s32.totalorder %s31, 1
      %p269 = scmp.ne.s32.totalorder %s264, %s266
      %p270 = scmp.eq.s32.totalorder %s31, 0
      %p271 = por %p269, %p270
      %p272 = scmp.ne.s32.totalorder %s264, %s266
      %p273 = scmp.eq.s32.totalorder %s36, 1
      %p274 = por %p272, %p273
      %p275 = scmp.ne.s32.totalorder %s266, %s267
      %p276 = scmp.eq.s32.totalorder %s36, 0
      %p277 = por %p275, %p276
      %p278 = scmp.ne.s32.totalorder %s266, %s267
      %p279 = scmp.eq.s32.totalorder %s37, 1
      %p280 = por %p278, %p279
      %p282 = scmp.ne.s32.totalorder %s267, %s281
      %p283 = scmp.eq.s32.totalorder %s37, 0
      %p284 = por %p282, %p283
      %s286 = sadd.s32 %s285, 1
      %p289 = scmp.eq.s32.totalorder %s31, 1
      %p290 = scmp.ne.s32.totalorder %s285, %s287
      %p291 = scmp.eq.s32.totalorder %s31, 0
      %p292 = por %p290, %p291
      %p293 = scmp.ne.s32.totalorder %s285, %s287
      %p294 = scmp.eq.s32.totalorder %s36, 1
      %p295 = por %p293, %p294
      %p296 = scmp.ne.s32.totalorder %s287, %s288
      %p297 = scmp.eq.s32.totalorder %s36, 0
      %p298 = por %p296, %p297
      %p299 = scmp.ne.s32.totalorder %s287, %s288
      %p300 = scmp.eq.s32.totalorder %s37, 1
      %p301 = por %p299, %p300
      %p303 = scmp.ne.s32.totalorder %s288, %s302
      %p304 = scmp.eq.s32.totalorder %s37, 0
      %p305 = por %p303, %p304
      %s307 = sadd.s32 %s306, 1
      %p310 = scmp.eq.s32.totalorder %s31, 1
      %p311 = scmp.ne.s32.totalorder %s306, %s308
      %p312 = scmp.eq.s32.totalorder %s31, 0
      %p313 = por %p311, %p312
      %p314 = scmp.ne.s32.totalorder %s306, %s308
      %p315 = scmp.eq.s32.totalorder %s36, 1
      %p316 = por %p314, %p315
      %p317 = scmp.ne.s32.totalorder %s308, %s309
      %p318 = scmp.eq.s32.totalorder %s36, 0
      %p319 = por %p317, %p318
      %p320 = scmp.ne.s32.totalorder %s308, %s309
      %p321 = scmp.eq.s32.totalorder %s37, 1
      %p322 = por %p320, %p321
      %p324 = scmp.ne.s32.totalorder %s309, %s323
      %p325 = scmp.eq.s32.totalorder %s37, 0
      %p326 = por %p324, %p325
      %s328 = sadd.s32 %s327, 1
      %p331 = scmp.eq.s32.totalorder %s31, 1
      %p332 = scmp.ne.s32.totalorder %s327, %s329
      %p333 = scmp.eq.s32.totalorder %s31, 0
      %p334 = por %p332, %p333
      %p335 = scmp.ne.s32.totalorder %s327, %s329
      %p336 = scmp.eq.s32.totalorder %s36, 1
      %p337 = por %p335, %p336
      %p338 = scmp.ne.s32.totalorder %s329, %s330
      %p339 = scmp.eq.s32.totalorder %s36, 0
      %p340 = por %p338, %p339
      %p341 = scmp.ne.s32.totalorder %s329, %s330
      %p342 = scmp.eq.s32.totalorder %s37, 1
      %p343 = por %p341, %p342
      %p345 = scmp.ne.s32.totalorder %s330, %s344
      %p346 = scmp.eq.s32.totalorder %s37, 0
      %p347 = por %p345, %p346
      %s349 = sadd.s32 %s348, 1
      %p352 = scmp.eq.s32.totalorder %s31, 1
      %p353 = scmp.ne.s32.totalorder %s348, %s350
      %p354 = scmp.eq.s32.totalorder %s31, 0
      %p355 = por %p353, %p354
      %p356 = scmp.ne.s32.totalorder %s348, %s350
      %p357 = scmp.eq.s32.totalorder %s36, 1
      %p358 = por %p356, %p357
      %p359 = scmp.ne.s32.totalorder %s350, %s351
      %p360 = scmp.eq.s32.totalorder %s36, 0
      %p361 = por %p359, %p360
      %p362 = scmp.ne.s32.totalorder %s350, %s351
      %p363 = scmp.eq.s32.totalorder %s37, 1
      %p364 = por %p362, %p363
      %p366 = scmp.ne.s32.totalorder %s351, %s365
      %p367 = scmp.eq.s32.totalorder %s37, 0
      %p368 = por %p366, %p367
      %s370 = sadd.s32 %s369, 1
      %p373 = scmp.eq.s32.totalorder %s31, 1
      %p374 = scmp.ne.s32.totalorder %s369, %s371
      %p375 = scmp.eq.s32.totalorder %s31, 0
      %p376 = por %p374, %p375
      %p377 = scmp.ne.s32.totalorder %s369, %s371
      %p378 = scmp.eq.s32.totalorder %s36, 1
      %p379 = por %p377, %p378
      %p380 = scmp.ne.s32.totalorder %s371, %s372
      %p381 = scmp.eq.s32.totalorder %s36, 0
      %p382 = por %p380, %p381
      %p383 = scmp.ne.s32.totalorder %s371, %s372
      %p384 = scmp.eq.s32.totalorder %s37, 1
      %p385 = por %p383, %p384
      %p387 = scmp.ne.s32.totalorder %s372, %s386
      %p388 = scmp.eq.s32.totalorder %s37, 0
      %p389 = por %p387, %p388
      %s391 = sadd.s32 %s390, 1
      %p394 = scmp.eq.s32.totalorder %s31, 1
      %p395 = scmp.ne.s32.totalorder %s390, %s392
      %p396 = scmp.eq.s32.totalorder %s31, 0
      %p397 = por %p395, %p396
      %p398 = scmp.ne.s32.totalorder %s390, %s392
      %p399 = scmp.eq.s32.totalorder %s36, 1
      %p400 = por %p398, %p399
      %p401 = scmp.ne.s32.totalorder %s392, %s393
      %p402 = scmp.eq.s32.totalorder %s36, 0
      %p403 = por %p401, %p402
      %p404 = scmp.ne.s32.totalorder %s392, %s393
      %p405 = scmp.eq.s32.totalorder %s37, 1
      %p406 = por %p404, %p405
      %p408 = scmp.ne.s32.totalorder %s393, %s407
      %p409 = scmp.eq.s32.totalorder %s37, 0
      %p410 = por %p408, %p409
      %s412 = sadd.s32 %s411, 1
      %p415 = scmp.eq.s32.totalorder %s31, 1
      %p416 = scmp.ne.s32.totalorder %s411, %s413
      %p417 = scmp.eq.s32.totalorder %s31, 0
      %p418 = por %p416, %p417
      %p419 = scmp.ne.s32.totalorder %s411, %s413
      %p420 = scmp.eq.s32.totalorder %s36, 1
      %p421 = por %p419, %p420
      %p422 = scmp.ne.s32.totalorder %s413, %s414
      %p423 = scmp.eq.s32.totalorder %s36, 0
      %p424 = por %p422, %p423
      %p425 = scmp.ne.s32.totalorder %s413, %s414
      %p426 = scmp.eq.s32.totalorder %s37, 1
      %p427 = por %p425, %p426
      %p429 = scmp.ne.s32.totalorder %s414, %s428
      %p430 = scmp.eq.s32.totalorder %s37, 0
      %p431 = por %p429, %p430
      %s433 = sadd.s32 %s432, 1
      %p436 = scmp.eq.s32.totalorder %s31, 1
      %p437 = scmp.ne.s32.totalorder %s432, %s434
      %p438 = scmp.eq.s32.totalorder %s31, 0
      %p439 = por %p437, %p438
      %p440 = scmp.ne.s32.totalorder %s432, %s434
      %p441 = scmp.eq.s32.totalorder %s36, 1
      %p442 = por %p440, %p441
      %p443 = scmp.ne.s32.totalorder %s434, %s435
      %p444 = scmp.eq.s32.totalorder %s36, 0
      %p445 = por %p443, %p444
      %p446 = scmp.ne.s32.totalorder %s434, %s435
      %p447 = scmp.eq.s32.totalorder %s37, 1
      %p448 = por %p446, %p447
      %p450 = scmp.ne.s32.totalorder %s435, %s449
      %p451 = scmp.eq.s32.totalorder %s37, 0
      %p452 = por %p450, %p451
      %s453 = ssub.s32 %s31, %s38
      %p454 = scmp.eq.s32.totalorder %s453, 0
      %s456 = sadd.s32 %s455, 1
      %s457 = scalar_select %p454, %s455, %s456
      %p460 = pneg %p454
      %p461 = scmp.eq.s32.totalorder %s31, 1
      %p462 = por %p460, %p461
      %p463 = scmp.ne.s32.totalorder %s455, %s458
      %p464 = scmp.eq.s32.totalorder %s31, 0
      %p465 = por %p463, %p464
      %p466 = scmp.ne.s32.totalorder %s455, %s458
      %p467 = scmp.eq.s32.totalorder %s36, 1
      %p468 = por %p466, %p467
      %p469 = scmp.ne.s32.totalorder %s458, %s459
      %p470 = scmp.eq.s32.totalorder %s36, 0
      %p471 = por %p469, %p470
      %p472 = scmp.ne.s32.totalorder %s458, %s459
      %p473 = scmp.eq.s32.totalorder %s37, 1
      %p474 = por %p472, %p473
      %p476 = scmp.ne.s32.totalorder %s459, %s475
      %p477 = scmp.eq.s32.totalorder %s37, 0
      %p478 = por %p476, %p477
      %s479 = ssub.s32 %s31, %s38
      %p480 = scmp.eq.s32.totalorder %s479, 0
      %s482 = sadd.s32 %s481, 1
      %s483 = scalar_select %p480, %s481, %s482
      %p486 = pneg %p480
      %p487 = scmp.eq.s32.totalorder %s31, 1
      %p488 = por %p486, %p487
      %p489 = scmp.ne.s32.totalorder %s481, %s484
      %p490 = scmp.eq.s32.totalorder %s31, 0
      %p491 = por %p489, %p490
      %p492 = scmp.ne.s32.totalorder %s481, %s484
      %p493 = scmp.eq.s32.totalorder %s36, 1
      %p494 = por %p492, %p493
      %p495 = scmp.ne.s32.totalorder %s484, %s485
      %p496 = scmp.eq.s32.totalorder %s36, 0
      %p497 = por %p495, %p496
      %p498 = scmp.ne.s32.totalorder %s484, %s485
      %p499 = scmp.eq.s32.totalorder %s37, 1
      %p500 = por %p498, %p499
      %p502 = scmp.ne.s32.totalorder %s485, %s501
      %p503 = scmp.eq.s32.totalorder %s37, 0
      %p504 = por %p502, %p503
      %s505 = ssub.s32 %s31, %s38
      %p506 = scmp.eq.s32.totalorder %s505, 0
      %s508 = sadd.s32 %s507, 1
      %s509 = scalar_select %p506, %s507, %s508
      %p512 = pneg %p506
      %p513 = scmp.eq.s32.totalorder %s31, 1
      %p514 = por %p512, %p513
      %p515 = scmp.ne.s32.totalorder %s507, %s510
      %p516 = scmp.eq.s32.totalorder %s31, 0
      %p517 = por %p515, %p516
      %p518 = scmp.ne.s32.totalorder %s507, %s510
      %p519 = scmp.eq.s32.totalorder %s36, 1
      %p520 = por %p518, %p519
      %p521 = scmp.ne.s32.totalorder %s510, %s511
      %p522 = scmp.eq.s32.totalorder %s36, 0
      %p523 = por %p521, %p522
      %p524 = scmp.ne.s32.totalorder %s510, %s511
      %p525 = scmp.eq.s32.totalorder %s37, 1
      %p526 = por %p524, %p525
      %p528 = scmp.ne.s32.totalorder %s511, %s527
      %p529 = scmp.eq.s32.totalorder %s37, 0
      %p530 = por %p528, %p529
      %p531 = scmp.le.s32.totalorder 1, %s31
      %p532 = scmp.lt.s32.totalorder %s31, 3
      %p533 = pnand %p531, %p532
      %p534 = pneg %p533
      // Predicated region
      $region9: #{_lambda_.5} parent=5 // pred_check
        _
      $region10: #{_lambda_.5} parent=5 // pred_check_branch
        %536 = sbr.rel (%p533) target = $region12
      $region11: #{_lambda_.5} parent=5 // pred_region
        %s537 = ssub.s32 %s31, 1
        // Predicated region
        $region13: #{_lambda_.5} parent=11 // pred_check
          %p538 = pneg %p130
        $region14: #{_lambda_.5} parent=11 // pred_check_branch
          %540 = sbr.rel (%p538) target = $region16
        $region15: #{_lambda_.5} parent=11 // pred_region
          _
        $region16: #{_lambda_.5} parent=11 // pred_fallthru
          _
        // Predicated region
        $region17: #{_lambda_.5} parent=11 // pred_check
          %p541 = pneg %p151
        $region18: #{_lambda_.5} parent=11 // pred_check_branch
          %543 = sbr.rel (%p541) target = $region20
        $region19: #{_lambda_.5} parent=11 // pred_region
          _
        $region20: #{_lambda_.5} parent=11 // pred_fallthru
          _
        // Predicated region
        $region21: #{_lambda_.5} parent=11 // pred_check
          %p544 = pneg %p172
        $region22: #{_lambda_.5} parent=11 // pred_check_branch
          %546 = sbr.rel (%p544) target = $region24
        $region23: #{_lambda_.5} parent=11 // pred_region
          _
        $region24: #{_lambda_.5} parent=11 // pred_fallthru
          _
        // Predicated region
        $region25: #{_lambda_.5} parent=11 // pred_check
          %p547 = pneg %p193
        $region26: #{_lambda_.5} parent=11 // pred_check_branch
          %549 = sbr.rel (%p547) target = $region28
        $region27: #{_lambda_.5} parent=11 // pred_region
          _
        $region28: #{_lambda_.5} parent=11 // pred_fallthru
          _
        // Predicated region
        $region29: #{_lambda_.5} parent=11 // pred_check
          %p550 = pneg %p214
        $region30: #{_lambda_.5} parent=11 // pred_check_branch
          %552 = sbr.rel (%p550) target = $region32
        $region31: #{_lambda_.5} parent=11 // pred_region
          _
        $region32: #{_lambda_.5} parent=11 // pred_fallthru
          _
        // Predicated region
        $region33: #{_lambda_.5} parent=11 // pred_check
          %p553 = pneg %p235
        $region34: #{_lambda_.5} parent=11 // pred_check_branch
          %555 = sbr.rel (%p553) target = $region36
        $region35: #{_lambda_.5} parent=11 // pred_region
          _
        $region36: #{_lambda_.5} parent=11 // pred_fallthru
          _
        // Predicated region
        $region37: #{_lambda_.5} parent=11 // pred_check
          %p556 = pneg %p256
        $region38: #{_lambda_.5} parent=11 // pred_check_branch
          %558 = sbr.rel (%p556) target = $region40
        $region39: #{_lambda_.5} parent=11 // pred_region
          _
        $region40: #{_lambda_.5} parent=11 // pred_fallthru
          _
        // Predicated region
        $region41: #{_lambda_.5} parent=11 // pred_check
          %p559 = pneg %p277
        $region42: #{_lambda_.5} parent=11 // pred_check_branch
          %561 = sbr.rel (%p559) target = $region44
        $region43: #{_lambda_.5} parent=11 // pred_region
          _
        $region44: #{_lambda_.5} parent=11 // pred_fallthru
          _
        // Predicated region
        $region45: #{_lambda_.5} parent=11 // pred_check
          %p562 = pneg %p298
        $region46: #{_lambda_.5} parent=11 // pred_check_branch
          %564 = sbr.rel (%p562) target = $region48
        $region47: #{_lambda_.5} parent=11 // pred_region
          _
        $region48: #{_lambda_.5} parent=11 // pred_fallthru
          _
        // Predicated region
        $region49: #{_lambda_.5} parent=11 // pred_check
          %p565 = pneg %p319
        $region50: #{_lambda_.5} parent=11 // pred_check_branch
          %567 = sbr.rel (%p565) target = $region52
        $region51: #{_lambda_.5} parent=11 // pred_region
          _
        $region52: #{_lambda_.5} parent=11 // pred_fallthru
          _
        // Predicated region
        $region53: #{_lambda_.5} parent=11 // pred_check
          %p568 = pneg %p340
        $region54: #{_lambda_.5} parent=11 // pred_check_branch
          %570 = sbr.rel (%p568) target = $region56
        $region55: #{_lambda_.5} parent=11 // pred_region
          _
        $region56: #{_lambda_.5} parent=11 // pred_fallthru
          _
        // Predicated region
        $region57: #{_lambda_.5} parent=11 // pred_check
          %p571 = pneg %p361
        $region58: #{_lambda_.5} parent=11 // pred_check_branch
          %573 = sbr.rel (%p571) target = $region60
        $region59: #{_lambda_.5} parent=11 // pred_region
          _
        $region60: #{_lambda_.5} parent=11 // pred_fallthru
          _
        // Predicated region
        $region61: #{_lambda_.5} parent=11 // pred_check
          %p574 = pneg %p382
        $region62: #{_lambda_.5} parent=11 // pred_check_branch
          %576 = sbr.rel (%p574) target = $region64
        $region63: #{_lambda_.5} parent=11 // pred_region
          _
        $region64: #{_lambda_.5} parent=11 // pred_fallthru
          _
        // Predicated region
        $region65: #{_lambda_.5} parent=11 // pred_check
          %p577 = pneg %p403
        $region66: #{_lambda_.5} parent=11 // pred_check_branch
          %579 = sbr.rel (%p577) target = $region68
        $region67: #{_lambda_.5} parent=11 // pred_region
          _
        $region68: #{_lambda_.5} parent=11 // pred_fallthru
          _
        // Predicated region
        $region69: #{_lambda_.5} parent=11 // pred_check
          %p580 = pneg %p424
        $region70: #{_lambda_.5} parent=11 // pred_check_branch
          %582 = sbr.rel (%p580) target = $region72
        $region71: #{_lambda_.5} parent=11 // pred_region
          _
        $region72: #{_lambda_.5} parent=11 // pred_fallthru
          _
        // Predicated region
        $region73: #{_lambda_.5} parent=11 // pred_check
          %p583 = pneg %p445
        $region74: #{_lambda_.5} parent=11 // pred_check_branch
          %585 = sbr.rel (%p583) target = $region76
        $region75: #{_lambda_.5} parent=11 // pred_region
          _
        $region76: #{_lambda_.5} parent=11 // pred_fallthru
          _
      $region12: #{_lambda_.5} parent=5 // pred_fallthru
        _
      %p586 = scmp.lt.s32.totalorder %s31, 2
      // Predicated region
      $region77: #{_lambda_.5} parent=5 // pred_check
        %p587 = pneg %p586
      $region78: #{_lambda_.5} parent=5 // pred_check_branch
        %589 = sbr.rel (%p587) target = $region80
      $region79: #{_lambda_.5} parent=5 // pred_region
        // Predicated region
        $region81: #{_lambda_.5} parent=79 // pred_check
          %p590 = pneg %p51
        $region82: #{_lambda_.5} parent=79 // pred_check_branch
          %592 = sbr.rel (%p590) target = $region84
        $region83: #{_lambda_.5} parent=79 // pred_region
          %p593 = scmp.lt.s32.totalorder %s31, 1
          %s594 = scalar_select %p593, %s31, 1
          %s595 = smul.addr %s594, 8
          %s596 = scalar_lea.vmem %s0, %s595
        $region84: #{_lambda_.5} parent=79 // pred_fallthru
          _
        // Predicated region
        $region85: #{_lambda_.5} parent=79 // pred_check
          %p597 = pneg %p77
        $region86: #{_lambda_.5} parent=79 // pred_check_branch
          %599 = sbr.rel (%p597) target = $region88
        $region87: #{_lambda_.5} parent=79 // pred_region
          %p600 = scmp.lt.s32.totalorder %s31, 1
          %s601 = scalar_select %p600, %s31, 1
          %s602 = scalar_lea.vmem %s1, %s601
        $region88: #{_lambda_.5} parent=79 // pred_fallthru
          _
        // Predicated region
        $region89: #{_lambda_.5} parent=79 // pred_check
          %p603 = pneg %p103
        $region90: #{_lambda_.5} parent=79 // pred_check_branch
          %605 = sbr.rel (%p603) target = $region92
        $region91: #{_lambda_.5} parent=79 // pred_region
          %p606 = scmp.lt.s32.totalorder %s31, 1
          %s607 = scalar_select %p606, %s31, 1
          %s608 = scalar_lea.vmem %s2, %s607
        $region92: #{_lambda_.5} parent=79 // pred_fallthru
          _
      $region80: #{_lambda_.5} parent=5 // pred_fallthru
        _
      %p609 = scmp.le.s32.totalorder 1, %s31
      %p610 = scmp.lt.s32.totalorder %s31, 3
      %p611 = pnand %p609, %p610
      %p612 = pneg %p611
      // Predicated region
      $region93: #{_lambda_.5} parent=5 // pred_check
        _
      $region94: #{_lambda_.5} parent=5 // pred_check_branch
        %614 = sbr.rel (%p611) target = $region96
      $region95: #{_lambda_.5} parent=5 // pred_region
        %s615 = ssub.s32 %s31, 1
        %p616 = scmp.lt.s32.totalorder %s36, 1
        %s617 = scalar_select %p616, %s36, 1
        %s618 = smul.addr %s617, 8
        %s619 = scalar_lea.vmem %s0, %s618
        %p620 = pneg %p57
        %p621 = pneg %p54
        %p622 = scmp.lt.s32.totalorder %s36, 1
        %s623 = scalar_select %p622, %s36, 1
        %s624 = scalar_lea.vmem %s1, %s623
        %p625 = pneg %p83
        %p626 = pneg %p80
        %p627 = scmp.lt.s32.totalorder %s36, 1
        %s628 = scalar_select %p627, %s36, 1
        %s629 = scalar_lea.vmem %s2, %s628
        %p630 = pneg %p109
        %p631 = pneg %p106
        %p632 = pneg %p130
        %p633 = pneg %p127
        %p634 = pneg %p151
        %p635 = pneg %p148
        %p636 = pneg %p172
        %p637 = pneg %p169
        %p638 = pneg %p193
        %p639 = pneg %p190
        %p640 = pneg %p214
        %p641 = pneg %p211
        %p642 = pneg %p235
        %p643 = pneg %p232
        %p644 = pneg %p256
        %p645 = pneg %p253
        %p646 = pneg %p277
        %p647 = pneg %p274
        %p648 = pneg %p298
        %p649 = pneg %p295
        %p650 = pneg %p319
        %p651 = pneg %p316
        %p652 = pneg %p340
        %p653 = pneg %p337
        %p654 = pneg %p361
        %p655 = pneg %p358
        %p656 = pneg %p382
        %p657 = pneg %p379
        %p658 = pneg %p403
        %p659 = pneg %p400
        %p660 = pneg %p424
        %p661 = pneg %p421
        %p662 = pneg %p445
        %p663 = pneg %p442
        %p664 = pneg %p471
        %p665 = pneg %p468
        %s666 = sand.u32 %s458, 1
        %s667 = scalar_lea.sflag [#allocation3], %s666
        %s668 = sand.u32 %s458, 1
        %s669 = scalar_lea.vmem [#allocation2], %s668
        %p670 = pneg %p497
        %p671 = pneg %p494
        %p672 = scmp.lt.s32.totalorder %s36, 1
        %s673 = scalar_select %p672, %s36, 1
        %s674 = scalar_lea.vmem %s20, %s673
        %p675 = pneg %p523
        %p676 = pneg %p520
        %p677 = scmp.lt.s32.totalorder %s36, 1
        %s678 = scalar_select %p677, %s36, 1
        %s679 = scalar_lea.vmem %s21, %s678
        %p680 = scmp.lt.s32.totalorder %s36, 1
        %s681 = scalar_select %p680, %s36, 1
        %s682 = smul.addr %s681, 8
        %s683 = scalar_lea.vmem %s0, %s682
        %p684 = scmp.lt.s32.totalorder %s36, 1
        %s685 = scalar_select %p684, %s36, 1
        %s686 = scalar_lea.vmem %s1, %s685
        %p687 = scmp.lt.s32.totalorder %s36, 1
        %s688 = scalar_select %p687, %s36, 1
        %s689 = scalar_lea.vmem %s2, %s688
        %p690 = scmp.lt.s32.totalorder %s36, 1
        %s691 = scalar_select %p690, %s36, 1
        %s692 = scalar_lea.vmem %s20, %s691
        %p693 = scmp.lt.s32.totalorder %s36, 1
        %s694 = scalar_select %p693, %s36, 1
        %s695 = scalar_lea.vmem %s21, %s694
        %v696 = vld [vmem:[%s683] sm:$0xff]
        %v697 = vld [vmem:[%s3] sm:$0x1]
        %v698 = vld [vmem:[%s3 + $0x1] sm:$0x1]
        %vm699 = vcmask 261120
        %v700 = vsel %vm699, %v696, 0.0
        %701 = vadd.xlane.f32.xlu0 %v700
        %v702 = vpop.xlane.xlu0 %701
        %v703 = vrcp.pop 32.0
        %v704 = vmul.f32 32.0, %v703
        %v705 = vsub.f32 1.0, %v704
        %v706 = vmul.f32 %v703, %v705
        %v707 = vadd.f32 %v703, %v706
        %vm708 = vweird.f32 %v703
        %v709 = vsel %vm708, %v703, %v707
        %v710 = vmul.f32 %v702, %v709
        %v711 = vsub.f32 %v696, %v710
        %v712 = vmul.f32 %v711, %v711
        %v713 = vsel %vm699, %v712, 0.0
        %714 = vadd.xlane.f32.xlu0 %v713
        %v715 = vpop.xlane.xlu0 %714
        %v716 = vmul.f32 %v715, %v709
        %v717 = vadd.f32 %v716, 1e-05
        %v718 = vrsqrt.pop %v717
        %v719 = vmul.f32 %v718, %v717
        %v720 = vmul.f32 %v719, %v718
        %v721 = vmul.f32 0.5, %v720
        %v722 = vsub.f32 1.5, %v721
        %v723 = vmul.f32 %v718, %v722
        %vm724 = vweird.f32 %v717
        %vm725 = vweird.f32 %v718
        %vm726 = vmor %vm724, %vm725
        %v727 = vsel %vm726, %v718, %v723
        %v728 = vmul.f32 %v711, %v727
        %v729 = vperm.slane %v697, 0
        %v730 = vmul.f32 %v728, %v729
        %v731 = vperm.slane %v698, 0
        %v732 = vadd.f32 %v730, %v731
        %v733 = vld [vmem:[%s4] sm:$0xff]
        %v734 = vld [vmem:[%s4 + $0x8] sm:$0xff]
        %v735 = vld [vmem:[%s4 + $0x10] sm:$0xff]
        %v736 = vld [vmem:[%s4 + $0x18] sm:$0xff]
        %v737 = vld [vmem:[%s5] sm:$0x1]
        %v739 = vperm.slane %v737, 0
        %v742 = vsel %vm699, %v732, 0
        %744 = vmatpush.msra.mxu0 0.0
        %745 = vmatpush.msra.mxu0 0.0
        %746 = vmatpush.msra.mxu0 0.0
        %747 = vmatpush.msra.mxu0 0.0
        %748 = vmatpush.msra.mxu0 0.0
        %749 = vmatpush.msra.mxu0 0.0
        %750 = vmatpush.msra.mxu0 0.0
        %751 = vmatpush.msra.mxu0 0.0
        %752 = vmatpush.msra.mxu0 0.0
        %753 = vmatpush.msra.mxu0 0.0
        %754 = vmatpush.msra.mxu0 0.0
        %755 = vmatpush.msra.mxu0 0.0
        %756 = vmatpush.msra.mxu0 %v736
        %757 = vmatpush.msra.mxu0 %v735
        %758 = vmatpush.msra.mxu0 %v734
        %759 = vmatpush.msra.mxu0 %v733
        %760 = vmatmul.f32.gmra.mxu0 %v742
        %v761 = vpop.f32.mrf.mxu0
        %v762 = vadd.f32 %v739, %v761
        %763 = vdwg.mxu0
        %765 = vrot.lane.b32.xlu0 %v762, 96
        %v766 = vpop.permute.xlu0 %765
        %vm767 = vcmask 130048
        %v768 = vsel %vm767, %v762, 0
        %v770 = vsel %vm767, %v766, 0
        %772 = vmatpush.xpose.msra.mxu0 0.0
        %773 = vmatpush.xpose.msra.mxu0 0.0
        %774 = vmatpush.xpose.msra.mxu0 0.0
        %775 = vmatpush.xpose.msra.mxu0 0.0
        %776 = vmatpush.xpose.msra.mxu0 0.0
        %777 = vmatpush.xpose.msra.mxu0 0.0
        %778 = vmatpush.xpose.msra.mxu0 0.0
        %779 = vmatpush.xpose.msra.mxu0 0.0
        %780 = vmatpush.xpose.msra.mxu0 0.0
        %781 = vmatpush.xpose.msra.mxu0 0.0
        %782 = vmatpush.xpose.msra.mxu0 0.0
        %783 = vmatpush.xpose.msra.mxu0 0.0
        %784 = vmatpush.xpose.msra.mxu0 0.0
        %785 = vmatpush.xpose.msra.mxu0 0.0
        %786 = vmatpush.xpose.msra.mxu0 0.0
        %787 = vmatpush.xpose.msra.mxu0 %v770
        %788 = vmatmul.f32.gmra.mxu0 %v768
        %v789 = vpop.f32.mrf.mxu0
        %v790 = vadd.f32 0.0, %v789
        %791 = vdwg.mxu0
        %v792 = vmul.f32 %v790, 0.25
        %vm793 = vcmask 64512
        %v794 = vsel %vm793, %v792, -inf
        %795 = vmax.xlane.f32.xlu0 %v794
        %v796 = vpop.xlane.xlu0 %795
        %v797 = vsub.f32 %v792, %v796
        %v798 = vmul.f32 %v797, 1.442695
        %v799 = vpow.pop %v798
        %v800 = vsel %vm793, %v799, 0.0
        %801 = vadd.xlane.f32.xlu0 %v800
        %v802 = vpop.xlane.xlu0 %801
        %v803 = vrcp.pop %v802
        %v804 = vmul.f32 %v799, %v803
        %805 = vrot.lane.b32.xlu0 %v762, 64
        %v806 = vpop.permute.xlu0 %805
        %v809 = vsel %vm793, %v804, 0
        %811 = vmatpush.msra.mxu0 0.0
        %812 = vmatpush.msra.mxu0 0.0
        %813 = vmatpush.msra.mxu0 0.0
        %814 = vmatpush.msra.mxu0 0.0
        %815 = vmatpush.msra.mxu0 0.0
        %816 = vmatpush.msra.mxu0 0.0
        %817 = vmatpush.msra.mxu0 0.0
        %818 = vmatpush.msra.mxu0 0.0
        %819 = vmatpush.msra.mxu0 0.0
        %820 = vmatpush.msra.mxu0 0.0
        %821 = vmatpush.msra.mxu0 0.0
        %822 = vmatpush.msra.mxu0 0.0
        %823 = vmatpush.msra.mxu0 0.0
        %824 = vmatpush.msra.mxu0 0.0
        %825 = vmatpush.msra.mxu0 0.0
        %826 = vmatpush.msra.mxu0 %v806
        %827 = vmatmul.f32.gmra.mxu0 %v809
        %v828 = vpop.f32.mrf.mxu0
        %v829 = vadd.f32 0.0, %v828
        %830 = vdwg.mxu0
        %v831 = vld [vmem:[%s6] sm:$0xff]
        %v832 = vld [vmem:[%s6 + $0x8] sm:$0xff]
        %833 = vrot.lane.b32.xlu0 %v762, 112
        %v834 = vpop.permute.xlu0 %833
        %835 = vrot.lane.b32.xlu0 %v762, 80
        %v836 = vpop.permute.xlu0 %835
        %v837 = vsel %vm767, %v834, 0
        %v839 = vsel %vm767, %v836, 0
        %841 = vmatpush.xpose.msra.mxu0 0.0
        %842 = vmatpush.xpose.msra.mxu0 0.0
        %843 = vmatpush.xpose.msra.mxu0 0.0
        %844 = vmatpush.xpose.msra.mxu0 0.0
        %845 = vmatpush.xpose.msra.mxu0 0.0
        %846 = vmatpush.xpose.msra.mxu0 0.0
        %847 = vmatpush.xpose.msra.mxu0 0.0
        %848 = vmatpush.xpose.msra.mxu0 0.0
        %849 = vmatpush.xpose.msra.mxu0 0.0
        %850 = vmatpush.xpose.msra.mxu0 0.0
        %851 = vmatpush.xpose.msra.mxu0 0.0
        %852 = vmatpush.xpose.msra.mxu0 0.0
        %853 = vmatpush.xpose.msra.mxu0 0.0
        %854 = vmatpush.xpose.msra.mxu0 0.0
        %855 = vmatpush.xpose.msra.mxu0 0.0
        %856 = vmatpush.xpose.msra.mxu0 %v839
        %857 = vmatmul.f32.gmra.mxu0 %v837
        %v858 = vpop.f32.mrf.mxu0
        %v859 = vadd.f32 0.0, %v858
        %860 = vdwg.mxu0
        %v861 = vmul.f32 %v859, 0.25
        %v862 = vsel %vm793, %v861, -inf
        %863 = vmax.xlane.f32.xlu0 %v862
        %v864 = vpop.xlane.xlu0 %863
        %v865 = vsub.f32 %v861, %v864
        %v866 = vmul.f32 %v865, 1.442695
        %v867 = vpow.pop %v866
        %v868 = vsel %vm793, %v867, 0.0
        %869 = vadd.xlane.f32.xlu0 %v868
        %v870 = vpop.xlane.xlu0 %869
        %v871 = vrcp.pop %v870
        %v872 = vmul.f32 %v867, %v871
        %873 = vrot.lane.b32.xlu0 %v762, 48
        %v874 = vpop.permute.xlu0 %873
        %v877 = vsel %vm793, %v872, 0
        %879 = vmatpush.msra.mxu0 0.0
        %880 = vmatpush.msra.mxu0 0.0
        %881 = vmatpush.msra.mxu0 0.0
        %882 = vmatpush.msra.mxu0 0.0
        %883 = vmatpush.msra.mxu0 0.0
        %884 = vmatpush.msra.mxu0 0.0
        %885 = vmatpush.msra.mxu0 0.0
        %886 = vmatpush.msra.mxu0 0.0
        %887 = vmatpush.msra.mxu0 0.0
        %888 = vmatpush.msra.mxu0 0.0
        %889 = vmatpush.msra.mxu0 0.0
        %890 = vmatpush.msra.mxu0 0.0
        %891 = vmatpush.msra.mxu0 0.0
        %892 = vmatpush.msra.mxu0 0.0
        %893 = vmatpush.msra.mxu0 0.0
        %894 = vmatpush.msra.mxu0 %v874
        %895 = vmatmul.f32.gmra.mxu0 %v877
        %v896 = vpop.f32.mrf.mxu0
        %v897 = vadd.f32 0.0, %v896
        %898 = vdwg.mxu0
        %s899 = scalar_lea.vmem %s6, 16
        %v900 = vld [vmem:[%s899] sm:$0xff]
        %v901 = vld [vmem:[%s899 + $0x8] sm:$0xff]
        %v903 = vsel %vm767, %v897, 0
        %905 = vmatpush.msra.mxu0 0.0
        %906 = vmatpush.msra.mxu0 0.0
        %907 = vmatpush.msra.mxu0 0.0
        %908 = vmatpush.msra.mxu0 0.0
        %909 = vmatpush.msra.mxu0 0.0
        %910 = vmatpush.msra.mxu0 0.0
        %911 = vmatpush.msra.mxu0 0.0
        %912 = vmatpush.msra.mxu0 0.0
        %913 = vmatpush.msra.mxu0 0.0
        %914 = vmatpush.msra.mxu0 0.0
        %915 = vmatpush.msra.mxu0 0.0
        %916 = vmatpush.msra.mxu0 0.0
        %917 = vmatpush.msra.mxu0 0.0
        %918 = vmatpush.msra.mxu0 0.0
        %919 = vmatpush.msra.mxu0 %v901
        %920 = vmatpush.msra.mxu0 %v900
        %921 = vmatmul.f32.gmra.mxu0 %v903
        %v922 = vpop.f32.mrf.mxu0
        %v923 = vadd.f32 0.0, %v922
        %924 = vdwg.mxu0
        %v926 = vsel %vm767, %v829, 0
        %928 = vmatpush.msra.mxu0 0.0
        %929 = vmatpush.msra.mxu0 0.0
        %930 = vmatpush.msra.mxu0 0.0
        %931 = vmatpush.msra.mxu0 0.0
        %932 = vmatpush.msra.mxu0 0.0
        %933 = vmatpush.msra.mxu0 0.0
        %934 = vmatpush.msra.mxu0 0.0
        %935 = vmatpush.msra.mxu0 0.0
        %936 = vmatpush.msra.mxu0 0.0
        %937 = vmatpush.msra.mxu0 0.0
        %938 = vmatpush.msra.mxu0 0.0
        %939 = vmatpush.msra.mxu0 0.0
        %940 = vmatpush.msra.mxu0 0.0
        %941 = vmatpush.msra.mxu0 0.0
        %942 = vmatpush.msra.mxu0 %v832
        %943 = vmatpush.msra.mxu0 %v831
        %944 = vmatmul.f32.gmra.mxu0 %v926
        %v945 = vpop.f32.mrf.mxu0
        %v946 = vadd.f32 %v923, %v945
        %947 = vdwg.mxu0
        %v948 = vadd.f32 %v696, %v946
        %v949 = vld [vmem:[%s7] sm:$0x1]
        %v951 = vperm.slane %v949, 0
        %v953 = vadd.f32 %v948, %v951
        %v954 = vld [vmem:[%s3 + $0x2] sm:$0x1]
        %v955 = vld [vmem:[%s3 + $0x3] sm:$0x1]
        %v956 = vsel %vm699, %v953, 0.0
        %957 = vadd.xlane.f32.xlu0 %v956
        %v958 = vpop.xlane.xlu0 %957
        %v959 = vmul.f32 %v958, %v709
        %v960 = vsub.f32 %v953, %v959
        %v961 = vmul.f32 %v960, %v960
        %v962 = vsel %vm699, %v961, 0.0
        %963 = vadd.xlane.f32.xlu0 %v962
        %v964 = vpop.xlane.xlu0 %963
        %v965 = vmul.f32 %v964, %v709
        %v966 = vadd.f32 %v965, 1e-05
        %v967 = vrsqrt.pop %v966
        %v968 = vmul.f32 %v967, %v966
        %v969 = vmul.f32 %v968, %v967
        %v970 = vmul.f32 0.5, %v969
        %v971 = vsub.f32 1.5, %v970
        %v972 = vmul.f32 %v967, %v971
        %vm973 = vweird.f32 %v966
        %vm974 = vweird.f32 %v967
        %vm975 = vmor %vm973, %vm974
        %v976 = vsel %vm975, %v967, %v972
        %v977 = vmul.f32 %v960, %v976
        %v978 = vperm.slane %v954, 0
        %v979 = vmul.f32 %v977, %v978
        %v980 = vperm.slane %v955, 0
        %v981 = vadd.f32 %v979, %v980
        %v982 = vld [vmem:[%s8] sm:$0xff]
        %v983 = vld [vmem:[%s8 + $0x8] sm:$0xff]
        %v984 = vld [vmem:[%s8 + $0x10] sm:$0xff]
        %v985 = vld [vmem:[%s8 + $0x18] sm:$0xff]
        %v986 = vld [vmem:[%s9] sm:$0x1]
        %v988 = vperm.slane %v986, 0
        %v991 = vsel %vm699, %v981, 0
        %993 = vmatpush.msra.mxu0 0.0
        %994 = vmatpush.msra.mxu0 0.0
        %995 = vmatpush.msra.mxu0 0.0
        %996 = vmatpush.msra.mxu0 0.0
        %997 = vmatpush.msra.mxu0 0.0
        %998 = vmatpush.msra.mxu0 0.0
        %999 = vmatpush.msra.mxu0 0.0
        %1000 = vmatpush.msra.mxu0 0.0
        %1001 = vmatpush.msra.mxu0 0.0
        %1002 = vmatpush.msra.mxu0 0.0
        %1003 = vmatpush.msra.mxu0 0.0
        %1004 = vmatpush.msra.mxu0 0.0
        %1005 = vmatpush.msra.mxu0 %v985
        %1006 = vmatpush.msra.mxu0 %v984
        %1007 = vmatpush.msra.mxu0 %v983
        %1008 = vmatpush.msra.mxu0 %v982
        %1009 = vmatmul.f32.gmra.mxu0 %v991
        %v1010 = vpop.f32.mrf.mxu0
        %v1011 = vadd.f32 %v988, %v1010
        %1012 = vdwg.mxu0
        %v1013 = vmax.f32 %v1011, 0.0
        %v1014 = vld [vmem:[%s10] sm:$0xff]
        %v1015 = vld [vmem:[%s10 + $0x8] sm:$0xff]
        %v1016 = vld [vmem:[%s10 + $0x10] sm:$0xff]
        %v1017 = vld [vmem:[%s10 + $0x18] sm:$0xff]
        %v1018 = vld [vmem:[%s10 + $0x20] sm:$0xff]
        %v1019 = vld [vmem:[%s10 + $0x28] sm:$0xff]
        %v1020 = vld [vmem:[%s10 + $0x30] sm:$0xff]
        %v1021 = vld [vmem:[%s10 + $0x38] sm:$0xff]
        %vm1022 = vcmask 523264
        %v1024 = vsel %vm1022, %v1013, 0
        %1026 = vmatpush.msra.mxu0 0.0
        %1027 = vmatpush.msra.mxu0 0.0
        %1028 = vmatpush.msra.mxu0 0.0
        %1029 = vmatpush.msra.mxu0 0.0
        %1030 = vmatpush.msra.mxu0 0.0
        %1031 = vmatpush.msra.mxu0 0.0
        %1032 = vmatpush.msra.mxu0 0.0
        %1033 = vmatpush.msra.mxu0 0.0
        %1034 = vmatpush.msra.mxu0 %v1021
        %1035 = vmatpush.msra.mxu0 %v1020
        %1036 = vmatpush.msra.mxu0 %v1019
        %1037 = vmatpush.msra.mxu0 %v1018
        %1038 = vmatpush.msra.mxu0 %v1017
        %1039 = vmatpush.msra.mxu0 %v1016
        %1040 = vmatpush.msra.mxu0 %v1015
        %1041 = vmatpush.msra.mxu0 %v1014
        %1042 = vmatmul.f32.gmra.mxu0 %v1024
        %v1043 = vpop.f32.mrf.mxu0
        %v1044 = vadd.f32 0.0, %v1043
        %1045 = vdwg.mxu0
        %v1046 = vadd.f32 %v953, %v1044
        %v1047 = vld [vmem:[%s11] sm:$0x1]
        %v1049 = vperm.slane %v1047, 0
        %v1051 = vadd.f32 %v1046, %v1049
        %v1052 = vld [vmem:[%s12] sm:$0xff]
        %v1053 = vld [vmem:[%s12 + $0x8] sm:$0xff]
        %v1054 = vld [vmem:[%s12 + $0x10] sm:$0xff]
        %v1055 = vld [vmem:[%s12 + $0x18] sm:$0xff]
        %v1056 = vld [vmem:[%s13] sm:$0x1]
        %v1058 = vperm.slane %v1056, 0
        %v1061 = vsel %vm699, %v1051, 0
        %1063 = vmatpush.msra.mxu0 0.0
        %1064 = vmatpush.msra.mxu0 0.0
        %1065 = vmatpush.msra.mxu0 0.0
        %1066 = vmatpush.msra.mxu0 0.0
        %1067 = vmatpush.msra.mxu0 0.0
        %1068 = vmatpush.msra.mxu0 0.0
        %1069 = vmatpush.msra.mxu0 0.0
        %1070 = vmatpush.msra.mxu0 0.0
        %1071 = vmatpush.msra.mxu0 0.0
        %1072 = vmatpush.msra.mxu0 0.0
        %1073 = vmatpush.msra.mxu0 0.0
        %1074 = vmatpush.msra.mxu0 0.0
        %1075 = vmatpush.msra.mxu0 %v1055
        %1076 = vmatpush.msra.mxu0 %v1054
        %1077 = vmatpush.msra.mxu0 %v1053
        %1078 = vmatpush.msra.mxu0 %v1052
        %1079 = vmatmul.f32.gmra.mxu0 %v1061
        %v1080 = vpop.f32.mrf.mxu0
        %v1081 = vadd.f32 %v1058, %v1080
        %1082 = vdwg.mxu0
        %v1083 = vlaneseq
        %v1084 = vshrl.u32 %v1083, 7
        %v1085 = vlaneseq
        %v1086 = vand.u32 %v1085, 127
        %v1087 = vmul.u32 %v1084, 8
        %vm1088 = vcmp.ge.s32.totalorder %v1086, %v1087
        %v1089 = vadd.s32 %v1084, 1
        %v1090 = vmul.u32 %v1089, 8
        %vm1091 = vcmp.lt.s32.totalorder %v1086, %v1090
        %vm1092 = vmand %vm1088, %vm1091
        %v1093 = vsel %vm1092, 1.0, 0.0
        %v1095 = vsel %vm793, %v1093, 0
        %1097 = vmatpush.msra.mxu0 0.0
        %1098 = vmatpush.msra.mxu0 0.0
        %1099 = vmatpush.msra.mxu0 0.0
        %1100 = vmatpush.msra.mxu0 0.0
        %1101 = vmatpush.msra.mxu0 0.0
        %1102 = vmatpush.msra.mxu0 0.0
        %1103 = vmatpush.msra.mxu0 0.0
        %1104 = vmatpush.msra.mxu0 0.0
        %1105 = vmatpush.msra.mxu0 0.0
        %1106 = vmatpush.msra.mxu0 0.0
        %1107 = vmatpush.msra.mxu0 0.0
        %1108 = vmatpush.msra.mxu0 0.0
        %1109 = vmatpush.msra.mxu0 0.0
        %1110 = vmatpush.msra.mxu0 0.0
        %1111 = vmatpush.msra.mxu0 0.0
        %1112 = vmatpush.msra.mxu0 %v1081
        %1113 = vmatmul.f32.gmra.mxu0 %v1095
        %v1114 = vpop.f32.mrf.mxu0
        %v1115 = vadd.f32 0.0, %v1114
        %1116 = vdwg.mxu0
        %v1117 = vmul.f32 %v1081, %v1081
        %1118 = vmatpush.msra.mxu0 0.0
        %1119 = vmatpush.msra.mxu0 0.0
        %1120 = vmatpush.msra.mxu0 0.0
        %1121 = vmatpush.msra.mxu0 0.0
        %1122 = vmatpush.msra.mxu0 0.0
        %1123 = vmatpush.msra.mxu0 0.0
        %1124 = vmatpush.msra.mxu0 0.0
        %1125 = vmatpush.msra.mxu0 0.0
        %1126 = vmatpush.msra.mxu0 0.0
        %1127 = vmatpush.msra.mxu0 0.0
        %1128 = vmatpush.msra.mxu0 0.0
        %1129 = vmatpush.msra.mxu0 0.0
        %1130 = vmatpush.msra.mxu0 0.0
        %1131 = vmatpush.msra.mxu0 0.0
        %1132 = vmatpush.msra.mxu0 0.0
        %1133 = vmatpush.msra.mxu0 %v1117
        %1134 = vmatmul.f32.gmra.mxu0 %v1095
        %v1135 = vpop.f32.mrf.mxu0
        %v1136 = vadd.f32 0.0, %v1135
        %1137 = vdwg.mxu0
        %v1138 = vld [vmem:[%s686] sm:$0x1]
        %v1139 = vmul.f32 %v1115, 0.125
        %v1140 = vmul.f32 %v1139, %v1138
        %v1141 = vmul.f32 %v1138, %v1138
        %v1142 = vmul.f32 %v1136, %v1141
        %vm1143 = vcmask 253952
        %v1144 = vsel %vm1143, %v1142, 0.0
        %1145 = vadd.xlane.f32.xlu0 %v1144
        %v1146 = vpop.xlane.xlu0 %1145
        %v1147 = vld [vmem:[%s689] sm:$0x1]
        %v1148 = vld [vmem:[%s14] sm:$0xff]
        %v1149 = vld [vmem:[%s14 + $0x8] sm:$0xff]
        %v1150 = vld [vmem:[%s14 + $0x10] sm:$0xff]
        %v1151 = vld [vmem:[%s14 + $0x18] sm:$0xff]
        %v1152 = vld [vmem:[%s15] sm:$0xff]
        %v1153 = vld [vmem:[%s15 + $0x8] sm:$0xff]
        %v1154 = vld [vmem:[%s15 + $0x10] sm:$0xff]
        %v1155 = vld [vmem:[%s15 + $0x18] sm:$0xff]
        %v1157 = vsel %vm699, %v1140, 0
        %1159 = vmatpush.msra.mxu0 0.0
        %1160 = vmatpush.msra.mxu0 0.0
        %1161 = vmatpush.msra.mxu0 0.0
        %1162 = vmatpush.msra.mxu0 0.0
        %1163 = vmatpush.msra.mxu0 0.0
        %1164 = vmatpush.msra.mxu0 0.0
        %1165 = vmatpush.msra.mxu0 0.0
        %1166 = vmatpush.msra.mxu0 0.0
        %1167 = vmatpush.msra.mxu0 0.0
        %1168 = vmatpush.msra.mxu0 0.0
        %1169 = vmatpush.msra.mxu0 0.0
        %1170 = vmatpush.msra.mxu0 0.0
        %1171 = vmatpush.msra.mxu0 %v1155
        %1172 = vmatpush.msra.mxu0 %v1154
        %1173 = vmatpush.msra.mxu0 %v1153
        %1174 = vmatpush.msra.mxu0 %v1152
        %1175 = vmatmul.f32.gmra.mxu0 %v1157
        %v1176 = vpop.f32.mrf.mxu0
        %v1177 = vadd.f32 0.0, %v1176
        %1178 = vdwg.mxu0
        %v1180 = vsel %vm699, %v1147, 0
        %1182 = vmatpush.msra.mxu0 0.0
        %1183 = vmatpush.msra.mxu0 0.0
        %1184 = vmatpush.msra.mxu0 0.0
        %1185 = vmatpush.msra.mxu0 0.0
        %1186 = vmatpush.msra.mxu0 0.0
        %1187 = vmatpush.msra.mxu0 0.0
        %1188 = vmatpush.msra.mxu0 0.0
        %1189 = vmatpush.msra.mxu0 0.0
        %1190 = vmatpush.msra.mxu0 0.0
        %1191 = vmatpush.msra.mxu0 0.0
        %1192 = vmatpush.msra.mxu0 0.0
        %1193 = vmatpush.msra.mxu0 0.0
        %1194 = vmatpush.msra.mxu0 %v1151
        %1195 = vmatpush.msra.mxu0 %v1150
        %1196 = vmatpush.msra.mxu0 %v1149
        %1197 = vmatpush.msra.mxu0 %v1148
        %1198 = vmatmul.f32.gmra.mxu0 %v1180
        %v1199 = vpop.f32.mrf.mxu0
        %v1200 = vadd.f32 %v1177, %v1199
        %1201 = vdwg.mxu0
        %v1202 = vld [vmem:[%s16] sm:$0x1]
        %v1203 = vadd.f32 %v1200, %v1202
        %v1204 = vld [vmem:[%s17] sm:$0xff]
        %v1205 = vld [vmem:[%s17 + $0x8] sm:$0xff]
        %v1206 = vld [vmem:[%s17 + $0x10] sm:$0xff]
        %v1207 = vld [vmem:[%s17 + $0x18] sm:$0xff]
        %v1208 = vld [vmem:[%s18] sm:$0x1]
        %1209 = vmatpush.msra.mxu0 0.0
        %1210 = vmatpush.msra.mxu0 0.0
        %1211 = vmatpush.msra.mxu0 0.0
        %1212 = vmatpush.msra.mxu0 0.0
        %1213 = vmatpush.msra.mxu0 0.0
        %1214 = vmatpush.msra.mxu0 0.0
        %1215 = vmatpush.msra.mxu0 0.0
        %1216 = vmatpush.msra.mxu0 0.0
        %1217 = vmatpush.msra.mxu0 0.0
        %1218 = vmatpush.msra.mxu0 0.0
        %1219 = vmatpush.msra.mxu0 0.0
        %1220 = vmatpush.msra.mxu0 0.0
        %1221 = vmatpush.msra.mxu0 %v1207
        %1222 = vmatpush.msra.mxu0 %v1206
        %1223 = vmatpush.msra.mxu0 %v1205
        %1224 = vmatpush.msra.mxu0 %v1204
        %1225 = vmatmul.f32.gmra.mxu0 %v1157
        %v1226 = vpop.f32.mrf.mxu0
        %v1227 = vadd.f32 %v1208, %v1226
        %1228 = vdwg.mxu0
        %vm1229 = vcmask 24576
        %1230 = vst.msk [vmem:[%s669] sm:$0x1] %vm1229, %v1203
        %vm1231 = vcmask 122880
        %1232 = vst.msk [vmem:[%s692] sm:$0x1] %vm1231, %v1227
        %vm1233 = vcmask 0
        %1234 = vst.msk [vmem:[%s695] sm:$0x1] %vm1233, %v1146
        %s1235 = sand.u32 %s458, 1
        %s1236 = scalar_lea.sflag [#allocation3], %s1235
        %s1237 = sand.u32 %s458, 1
        %s1238 = scalar_lea.vmem [#allocation2], %s1237
        %p1239 = scmp.lt.s32.totalorder %s36, 1
        %s1240 = scalar_select %p1239, %s36, 1
        %s1241 = scalar_lea.vmem %s20, %s1240
        %p1242 = scmp.lt.s32.totalorder %s36, 1
        %s1243 = scalar_select %p1242, %s36, 1
        %s1244 = scalar_lea.vmem %s21, %s1243
        // Predicated region
        $region97: #{_lambda_.5} parent=95 // pred_check
          %p1245 = pneg %p468
        $region98: #{_lambda_.5} parent=95 // pred_check_branch
          %1247 = sbr.rel (%p1245) target = $region100
        $region99: #{_lambda_.5} parent=95 // pred_region
          %1249 = vsyncadd %s1236, 0
          %s1250 = scalar_lea.hbm %s19, %s36
          %s1252 = sshll.u32 %s1238, 4
          %s1253 = int_to_ptr.vmem [resolvable:$true] %s1252
          %s1254 = sshll.u32 %s1250, 4
          %s1255 = int_to_ptr.hbm [resolvable:$true] %s1254
          %1257 = dma.vmem_to_hbm [thread:$0]  %s1253, 16, %s1255, %s1236
        $region100: #{_lambda_.5} parent=95 // pred_fallthru
          _
        // Predicated region
        $region101: #{_lambda_.5} parent=95 // pred_check
          %p1258 = pneg %p494
        $region102: #{_lambda_.5} parent=95 // pred_check_branch
          %1260 = sbr.rel (%p1258) target = $region104
        $region103: #{_lambda_.5} parent=95 // pred_region
          _
        $region104: #{_lambda_.5} parent=95 // pred_fallthru
          _
        // Predicated region
        $region105: #{_lambda_.5} parent=95 // pred_check
          %p1261 = pneg %p520
        $region106: #{_lambda_.5} parent=95 // pred_check_branch
          %1263 = sbr.rel (%p1261) target = $region108
        $region107: #{_lambda_.5} parent=95 // pred_region
          _
        $region108: #{_lambda_.5} parent=95 // pred_fallthru
          _
      $region96: #{_lambda_.5} parent=5 // pred_fallthru
        _
      %p1264 = scmp.le.s32.totalorder 2, %s31
      // Predicated region
      $region109: #{_lambda_.5} parent=5 // pred_check
        %p1265 = pneg %p1264
      $region110: #{_lambda_.5} parent=5 // pred_check_branch
        %1267 = sbr.rel (%p1265) target = $region112
      $region111: #{_lambda_.5} parent=5 // pred_region
        %s1268 = ssub.s32 %s31, 2
        // Predicated region
        $region113: #{_lambda_.5} parent=111 // pred_check
          %p1269 = pneg %p474
        $region114: #{_lambda_.5} parent=111 // pred_check_branch
          %1271 = sbr.rel (%p1269) target = $region116
        $region115: #{_lambda_.5} parent=111 // pred_region
          %s1272 = sand.u32 %s459, 1
          %s1273 = scalar_lea.sflag [#allocation3], %s1272
          %s1274 = sand.u32 %s459, 1
          %s1275 = scalar_lea.vmem [#allocation2], %s1274
          %1277 = dma.done %s1273, 16
        $region116: #{_lambda_.5} parent=111 // pred_fallthru
          _
        // Predicated region
        $region117: #{_lambda_.5} parent=111 // pred_check
          %p1278 = pneg %p500
        $region118: #{_lambda_.5} parent=111 // pred_check_branch
          %1280 = sbr.rel (%p1278) target = $region120
        $region119: #{_lambda_.5} parent=111 // pred_region
          %p1281 = scmp.lt.s32.totalorder %s37, 1
          %s1282 = scalar_select %p1281, %s37, 1
          %s1283 = scalar_lea.vmem %s20, %s1282
        $region120: #{_lambda_.5} parent=111 // pred_fallthru
          _
        // Predicated region
        $region121: #{_lambda_.5} parent=111 // pred_check
          %p1284 = pneg %p526
        $region122: #{_lambda_.5} parent=111 // pred_check_branch
          %1286 = sbr.rel (%p1284) target = $region124
        $region123: #{_lambda_.5} parent=111 // pred_region
          %p1287 = scmp.lt.s32.totalorder %s37, 1
          %s1288 = scalar_select %p1287, %s37, 1
          %s1289 = scalar_lea.vmem %s21, %s1288
        $region124: #{_lambda_.5} parent=111 // pred_fallthru
          _
      $region112: #{_lambda_.5} parent=5 // pred_fallthru
        _
    $region6: #{_lambda_.5} parent=1 // loop_footer
      %s35 = sadd.s32 1, %s31
    $region7: #{_lambda_.5} parent=1 // loop_footer_branch
      %30 = sbr.rel target = $region3
    $region8: #{_lambda_.5} parent=1 // loop_exit
      _
    %1290 = vsyncpa [#allocation3], 1
    %s1291 = scalar_lea.sflag [#allocation3], 1
    %1292 = vsyncpa %s1291, 1

</llo_original>
